<compile_context>
chip_gen: v7x
topology: tpu7x:2x2x1
jax: 0.10.0
libtpu: 0.0.40
codegen_flags: <defaults>
</compile_context>

<pallas_src>
import functools
import math

import jax
import jax.numpy as jnp
import numpy as np
from jax.experimental import pallas as pl
from jax.experimental.pallas import tpu as pltpu

LEAK = 0.01
PAD_H = 256  # 220-wide linear layers padded to 256 (2 full 128-lane MXU tiles)


def _round_up(n, m):
    return ((n + m - 1) // m) * m


def _leaky(x):
    return jnp.where(x > 0, x, LEAK * x)


def _default_act_dtype():
    """bf16 activations on v6e/v7x (bf16-capable VPU); f32 on v5e and older."""
    try:
        kind = jax.devices()[0].device_kind.lower()
    except Exception:
        return jnp.bfloat16
    if any(g in kind for g in ("v2", "v3", "v4", "v5")):
        return jnp.float32
    return jnp.bfloat16


# ----------------------------- Pallas kernel --------------------------------
def _disc_kernel(x_ref,
                 w1_ref, b1_ref,
                 w2_ref, b2_ref,
                 w3_ref, b3_ref,
                 wl1_ref, bl1_ref,
                 wl2_ref, bl2_ref,
                 wl3_ref, bl3_ref,
                 out_ref,
                 *, act_dtype):
    """Activations live as (C, T): features on sublanes, batch tile T on the lane axis."""

    def dense(h, w_ref, b_ref):
        # bf16 operands on the MXU, f32 accumulation, f32 bias add.
        acc = jnp.dot(w_ref[...], h.astype(jnp.bfloat16),
                      preferred_element_type=jnp.float32)
        return acc + b_ref[...]

    x = x_ref[...]                                   # (4, T)  f32
    w1 = w1_ref[...]                                 # (32, 4) f32

    # conv_1 center tap (4 -> 32) on the VPU: unrolled outer-product accumulation.
    h = b1_ref[...] + w1[:, 0:1] * x[0:1, :]
    for c in range(1, 4):
        h = h + w1[:, c:c + 1] * x[c:c + 1, :]
    h = _leaky(h).astype(act_dtype)                                    # (32, T)

    h = _leaky(dense(h, w2_ref, b2_ref).astype(act_dtype))             # conv_2 center (64, T)
    h = _leaky(dense(h, w3_ref, b3_ref).astype(act_dtype))             # conv_3 center (128, T)
    h = _leaky(dense(h, wl1_ref, bl1_ref).astype(act_dtype))           # linear_1      (256, T)
    h = jnp.maximum(dense(h, wl2_ref, bl2_ref).astype(act_dtype), 0.0)  # linear_2+ReLU (256, T)

    # linear_3 (256 -> 1): VPU multiply + cross-sublane (XLU) reduction in f32.
    # Result is already lane-dense: a (1, T) row.
    prod = h.astype(jnp.float32) * wl3_ref[...]                        # (256, T) f32
    logit = jnp.sum(prod, axis=0, keepdims=True) + bl3_ref[...]        # (1, T)   f32

    # sigmoid: exp + approximate reciprocal, both on the EUP slot.
    out_ref[...] = pl.reciprocal(1.0 + jnp.exp(-logit), approx=True)


# ------------------------- one-time parameter prep ---------------------------
def prepare_params(params):
    """Center-tap slice, (C_out, C_in) orientation, 220->256 zero-pad, bf16 cast.  Call ONCE."""
    bf, f32 = jnp.bfloat16, jnp.float32

    def pad_to(a, shape):
        return jnp.pad(a, [(0, t - s) for s, t in zip(a.shape, shape)])

    def col(b, rows=None):
        b = b.reshape(-1, 1).astype(f32)
        return pad_to(b, (rows, 1)) if rows is not None else b

    return {
        # conv_1 runs on the VPU -> keep its weight in f32.
        "w1": params["conv1_w"][:, :, 2].astype(f32),                 # (32, 4)   k=5 center tap
        "b1": col(params["conv1_b"]),                                 # (32, 1)
        "w2": params["conv2_w"][:, :, 2].astype(bf),                  # (64, 32)  k=5 center tap
        "b2": col(params["conv2_b"]),                                 # (64, 1)
        "w3": params["conv3_w"][:, :, 1].astype(bf),                  # (128, 64) k=3 center tap
        "b3": col(params["conv3_b"]),                                 # (128, 1)
        "wl1": pad_to(params["lin1_w"], (PAD_H, 128)).astype(bf),     # (256, 128)
        "bl1": col(params["lin1_b"], PAD_H),                          # (256, 1)
        "wl2": pad_to(params["lin2_w"], (PAD_H, PAD_H)).astype(bf),   # (256, 256)
        "bl2": col(params["lin2_b"], PAD_H),                          # (256, 1)
        # linear_3 runs on the VPU/XLU -> f32 column.
        "wl3": pad_to(params["lin3_w"].T, (PAD_H, 1)).astype(f32),    # (256, 1)
        "bl3": params["lin3_b"].reshape(1, 1).astype(f32),            # (1, 1)
    }


# ------------------------------- forward pass --------------------------------
def discriminator_forward(x, prep, *, tile_n=2048, act_dtype=None):
    """x: (N, 4, 1) float32 (PyTorch NCL).  Returns (N, 1) float32."""
    N, c_in, L = x.shape
    assert c_in == 4 and L == 1, "module's flatten requires L == 1"
    if act_dtype is None:
        act_dtype = _default_act_dtype()

    # Transposed layout: (features=4, batch) so the batch tile sits on the 128-lane axis
    # (lane-dense input DMA in, lane-dense output stores out).
    xt = x.reshape(N, c_in).T.astype(jnp.float32)                     # (4, N)

    # Batch tile: multiple of 128 lanes; capped so the parallel grid has >= 2 steps whenever
    # N allows it (keeps both v7x TensorCores busy).  Padded columns are zero, sliced off below.
    tile_n = _round_up(max(int(tile_n), 128), 128)
    tile_n = min(tile_n, _round_up((N + 1) // 2, 128))
    n_pad = _round_up(N, tile_n)
    if n_pad != N:
        xt = jnp.pad(xt, ((0, 0), (0, n_pad - N)))
    grid = (n_pad // tile_n,)

    weight_args = (prep["w1"], prep["b1"], prep["w2"], prep["b2"],
                   prep["w3"], prep["b3"], prep["wl1"], prep["bl1"],
                   prep["wl2"], prep["bl2"], prep["wl3"], prep["bl3"])

    in_specs = [pl.BlockSpec((c_in, tile_n), lambda i: (0, i))]
    # Weights/biases: full block, constant index_map -> VMEM-resident across grid steps.
    in_specs += [pl.BlockSpec(a.shape, lambda i: (0, 0)) for a in weight_args]
    out_spec = pl.BlockSpec((1, tile_n), lambda i: (0, i))            # lane-dense output slab

    out = pl.pallas_call(
        functools.partial(_disc_kernel, act_dtype=act_dtype),
        out_shape=jax.ShapeDtypeStruct((1, n_pad), jnp.float32),
        grid=grid,
        in_specs=in_specs,
        out_specs=out_spec,
        compiler_params=pltpu.CompilerParams(
            dimension_semantics=("parallel",),
            vmem_limit_bytes=32 * 1024 * 1024),
    )(xt, *weight_args)
    return out[0, :N].reshape(N, 1)


# ------------------------------ init & reference -----------------------------
def init_params(key):
    """Deterministic init mimicking PyTorch's default uniform(-1/sqrt(fan_in), ...)."""
    keys = jax.random.split(key, 12)

    def u(k, shape, fan_in):
        bound = 1.0 / math.sqrt(fan_in)
        return jax.random.uniform(k, shape, jnp.float32, -bound, bound)

    return {
        "conv1_w": u(keys[0], (32, 4, 5), 4 * 5),
        "conv1_b": u(keys[1], (32,), 4 * 5),
        "conv2_w": u(keys[2], (64, 32, 5), 32 * 5),
        "conv2_b": u(keys[3], (64,), 32 * 5),
        "conv3_w": u(keys[4], (128, 64, 3), 64 * 3),
        "conv3_b": u(keys[5], (128,), 64 * 3),
        "lin1_w": u(keys[6], (220, 128), 128),
        "lin1_b": u(keys[7], (220,), 128),
        "lin2_w": u(keys[8], (220, 220), 220),
        "lin2_b": u(keys[9], (220,), 220),
        "lin3_w": u(keys[10], (1, 220), 220),
        "lin3_b": u(keys[11], (1,), 220),
    }


def _reference_forward(x, params):
    """Pure-JAX reference using real 1D convs with 'SAME' padding (matches PyTorch)."""
    def conv1d(inp, w, b):
        y = jax.lax.conv_general_dilated(
            inp, w, window_strides=(1,), padding="SAME",
            dimension_numbers=("NCH", "OIH", "NCH"))
        return y + b[None, :, None]

    h = _leaky(conv1d(x, params["conv1_w"], params["conv1_b"]))
    h = _leaky(conv1d(h, params["conv2_w"], params["conv2_b"]))
    h = _leaky(conv1d(h, params["conv3_w"], params["conv3_b"]))
    flat = h.reshape(h.shape[0], h.shape[1])
    o = _leaky(flat @ params["lin1_w"].T + params["lin1_b"])
    o = jnp.maximum(o @ params["lin2_w"].T + params["lin2_b"], 0.0)
    o = jax.nn.sigmoid(o @ params["lin3_w"].T + params["lin3_b"])
    return o


if __name__ == "__main__":
    key = jax.random.PRNGKey(0)
    pkey, xkey, xkey2 = jax.random.split(key, 3)

    params = init_params(pkey)
    prep = jax.tree_util.tree_map(jax.block_until_ready, prepare_params(params))

    fwd = jax.jit(discriminator_forward, static_argnames=("tile_n", "act_dtype"))

    # Small batch (single grid step, padded lanes).
    x = jax.random.normal(xkey, (8, 4, 1), jnp.float32)
    out = jax.block_until_ready(fwd(x, prep))
    ref = jax.block_until_ready(_reference_forward(x, params))
    assert out.shape == (8, 1)
    np.testing.assert_allclose(np.asarray(out), np.asarray(ref), rtol=2e-2, atol=2e-2)

    # Larger, non-multiple batch exercising zero-padding + a multi-step parallel grid.
    x2 = jax.random.normal(xkey2, (300, 4, 1), jnp.float32)
    out2 = jax.block_until_ready(fwd(x2, prep))
    ref2 = jax.block_until_ready(_reference_forward(x2, params))
    assert out2.shape == (300, 1)
    np.testing.assert_allclose(np.asarray(out2), np.asarray(ref2), rtol=2e-2, atol=2e-2)

    print("KERNEL_OK")
</pallas_src>

<mosaic_0001>
module attributes {stable_mosaic.version = 11 : i64} {
  func.func @_disc_kernel(%arg0: i32, %arg1: memref<4x128xf32, #tpu.memory_space<vmem>>, %arg2: memref<32x4xf32, #tpu.memory_space<vmem>>, %arg3: memref<32x1xf32, #tpu.memory_space<vmem>>, %arg4: memref<64x32xbf16, #tpu.memory_space<vmem>>, %arg5: memref<64x1xf32, #tpu.memory_space<vmem>>, %arg6: memref<128x64xbf16, #tpu.memory_space<vmem>>, %arg7: memref<128x1xf32, #tpu.memory_space<vmem>>, %arg8: memref<256x128xbf16, #tpu.memory_space<vmem>>, %arg9: memref<256x1xf32, #tpu.memory_space<vmem>>, %arg10: memref<256x256xbf16, #tpu.memory_space<vmem>>, %arg11: memref<256x1xf32, #tpu.memory_space<vmem>>, %arg12: memref<256x1xf32, #tpu.memory_space<vmem>>, %arg13: memref<1x1xf32, #tpu.memory_space<vmem>>, %arg14: memref<1x128xf32, #tpu.memory_space<vmem>>) attributes {dimension_semantics = [#tpu.dimension_semantics<parallel>], iteration_bounds = array<i64: 1>, scalar_prefetch = 0 : i64, scratch_operands = 0 : i64, tpu.core_type = #tpu.core_type<tc>, window_params = [{transform_indices = @transform_0, window_bounds = array<i64: 4, 128>}, {pipeline_mode = #tpu.pipeline_mode<synchronous>, transform_indices = @transform_1, window_bounds = array<i64: 32, 4>}, {pipeline_mode = #tpu.pipeline_mode<synchronous>, transform_indices = @transform_2, window_bounds = array<i64: 32, 1>}, {pipeline_mode = #tpu.pipeline_mode<synchronous>, transform_indices = @transform_3, window_bounds = array<i64: 64, 32>}, {pipeline_mode = #tpu.pipeline_mode<synchronous>, transform_indices = @transform_4, window_bounds = array<i64: 64, 1>}, {pipeline_mode = #tpu.pipeline_mode<synchronous>, transform_indices = @transform_5, window_bounds = array<i64: 128, 64>}, {pipeline_mode = #tpu.pipeline_mode<synchronous>, transform_indices = @transform_6, window_bounds = array<i64: 128, 1>}, {pipeline_mode = #tpu.pipeline_mode<synchronous>, transform_indices = @transform_7, window_bounds = array<i64: 256, 128>}, {pipeline_mode = #tpu.pipeline_mode<synchronous>, transform_indices = @transform_8, window_bounds = array<i64: 256, 1>}, {pipeline_mode = #tpu.pipeline_mode<synchronous>, transform_indices = @transform_9, window_bounds = array<i64: 256, 256>}, {pipeline_mode = #tpu.pipeline_mode<synchronous>, transform_indices = @transform_10, window_bounds = array<i64: 256, 1>}, {pipeline_mode = #tpu.pipeline_mode<synchronous>, transform_indices = @transform_11, window_bounds = array<i64: 256, 1>}, {pipeline_mode = #tpu.pipeline_mode<synchronous>, transform_indices = @transform_12, window_bounds = array<i64: 1, 1>}, {transform_indices = @transform_13, window_bounds = array<i64: 1, 128>}]} {
    %c0 = arith.constant 0 : index
    %c0_0 = arith.constant 0 : index
    %0 = vector.load %arg1[%c0, %c0_0] : memref<4x128xf32, #tpu.memory_space<vmem>>, vector<4x128xf32>
    %c0_1 = arith.constant 0 : index
    %c0_2 = arith.constant 0 : index
    %1 = vector.load %arg2[%c0_1, %c0_2] : memref<32x4xf32, #tpu.memory_space<vmem>>, vector<32x4xf32>
    %c0_3 = arith.constant 0 : index
    %c0_4 = arith.constant 0 : index
    %2 = vector.load %arg3[%c0_3, %c0_4] : memref<32x1xf32, #tpu.memory_space<vmem>>, vector<32x1xf32>
    %3 = vector.extract_strided_slice %1 {offsets = [0, 0], sizes = [32, 1], strides = [1, 1]} : vector<32x4xf32> to vector<32x1xf32>
    %4 = vector.extract_strided_slice %0 {offsets = [0, 0], sizes = [1, 128], strides = [1, 1]} : vector<4x128xf32> to vector<1x128xf32>
    %5 = vector.broadcast %3 : vector<32x1xf32> to vector<32x128xf32>
    %6 = vector.broadcast %4 : vector<1x128xf32> to vector<32x128xf32>
    %7 = arith.mulf %5, %6 : vector<32x128xf32>
    %8 = vector.broadcast %2 : vector<32x1xf32> to vector<32x128xf32>
    %9 = arith.addf %8, %7 : vector<32x128xf32>
    %10 = vector.extract_strided_slice %1 {offsets = [0, 1], sizes = [32, 1], strides = [1, 1]} : vector<32x4xf32> to vector<32x1xf32>
    %11 = vector.extract_strided_slice %0 {offsets = [1, 0], sizes = [1, 128], strides = [1, 1]} : vector<4x128xf32> to vector<1x128xf32>
    %12 = vector.broadcast %10 : vector<32x1xf32> to vector<32x128xf32>
    %13 = vector.broadcast %11 : vector<1x128xf32> to vector<32x128xf32>
    %14 = arith.mulf %12, %13 : vector<32x128xf32>
    %15 = arith.addf %9, %14 : vector<32x128xf32>
    %16 = vector.extract_strided_slice %1 {offsets = [0, 2], sizes = [32, 1], strides = [1, 1]} : vector<32x4xf32> to vector<32x1xf32>
    %17 = vector.extract_strided_slice %0 {offsets = [2, 0], sizes = [1, 128], strides = [1, 1]} : vector<4x128xf32> to vector<1x128xf32>
    %18 = vector.broadcast %16 : vector<32x1xf32> to vector<32x128xf32>
    %19 = vector.broadcast %17 : vector<1x128xf32> to vector<32x128xf32>
    %20 = arith.mulf %18, %19 : vector<32x128xf32>
    %21 = arith.addf %15, %20 : vector<32x128xf32>
    %22 = vector.extract_strided_slice %1 {offsets = [0, 3], sizes = [32, 1], strides = [1, 1]} : vector<32x4xf32> to vector<32x1xf32>
    %23 = vector.extract_strided_slice %0 {offsets = [3, 0], sizes = [1, 128], strides = [1, 1]} : vector<4x128xf32> to vector<1x128xf32>
    %24 = vector.broadcast %22 : vector<32x1xf32> to vector<32x128xf32>
    %25 = vector.broadcast %23 : vector<1x128xf32> to vector<32x128xf32>
    %26 = arith.mulf %24, %25 : vector<32x128xf32>
    %27 = arith.addf %21, %26 : vector<32x128xf32>
    %cst = arith.constant 0.000000e+00 : f32
    %28 = vector.broadcast %cst : f32 to vector<32x128xf32>
    %29 = arith.cmpf ogt, %27, %28 : vector<32x128xf32>
    %cst_5 = arith.constant 0.00999999977 : f32
    %30 = vector.broadcast %cst_5 : f32 to vector<32x128xf32>
    %31 = arith.mulf %30, %27 : vector<32x128xf32>
    %32 = arith.select %29, %27, %31 : vector<32x128xi1>, vector<32x128xf32>
    %33 = arith.truncf %32 : vector<32x128xf32> to vector<32x128xbf16>
    %c0_6 = arith.constant 0 : index
    %c0_7 = arith.constant 0 : index
    %34 = vector.load %arg4[%c0_6, %c0_7] : memref<64x32xbf16, #tpu.memory_space<vmem>>, vector<64x32xbf16>
    %cst_8 = arith.constant dense<0.000000e+00> : vector<64x128xf32>
    %35 = tpu.matmul %34, %33, %cst_8 {dimension_numbers = #tpu.dot_dimension_numbers<[1], [0], [0], [1], [0, 0, 1, 1], [], []>} : vector<64x32xbf16>, vector<32x128xbf16>, vector<64x128xf32> -> vector<64x128xf32>
    %c0_9 = arith.constant 0 : index
    %c0_10 = arith.constant 0 : index
    %36 = vector.load %arg5[%c0_9, %c0_10] : memref<64x1xf32, #tpu.memory_space<vmem>>, vector<64x1xf32>
    %37 = vector.broadcast %36 : vector<64x1xf32> to vector<64x128xf32>
    %38 = arith.addf %35, %37 : vector<64x128xf32>
    %39 = arith.truncf %38 : vector<64x128xf32> to vector<64x128xbf16>
    %cst_11 = arith.constant 0.000000e+00 : bf16
    %40 = vector.broadcast %cst_11 : bf16 to vector<64x128xbf16>
    %41 = arith.cmpf ogt, %39, %40 : vector<64x128xbf16>
    %cst_12 = arith.constant 1.000980e-02 : bf16
    %42 = vector.broadcast %cst_12 : bf16 to vector<64x128xbf16>
    %43 = arith.mulf %42, %39 : vector<64x128xbf16>
    %44 = arith.select %41, %39, %43 : vector<64x128xi1>, vector<64x128xbf16>
    %c0_13 = arith.constant 0 : index
    %c0_14 = arith.constant 0 : index
    %45 = vector.load %arg6[%c0_13, %c0_14] : memref<128x64xbf16, #tpu.memory_space<vmem>>, vector<128x64xbf16>
    %cst_15 = arith.constant dense<0.000000e+00> : vector<128x128xf32>
    %46 = tpu.matmul %45, %44, %cst_15 {dimension_numbers = #tpu.dot_dimension_numbers<[1], [0], [0], [1], [0, 0, 1, 1], [], []>} : vector<128x64xbf16>, vector<64x128xbf16>, vector<128x128xf32> -> vector<128x128xf32>
    %c0_16 = arith.constant 0 : index
    %c0_17 = arith.constant 0 : index
    %47 = vector.load %arg7[%c0_16, %c0_17] : memref<128x1xf32, #tpu.memory_space<vmem>>, vector<128x1xf32>
    %48 = vector.broadcast %47 : vector<128x1xf32> to vector<128x128xf32>
    %49 = arith.addf %46, %48 : vector<128x128xf32>
    %50 = arith.truncf %49 : vector<128x128xf32> to vector<128x128xbf16>
    %cst_18 = arith.constant 0.000000e+00 : bf16
    %51 = vector.broadcast %cst_18 : bf16 to vector<128x128xbf16>
    %52 = arith.cmpf ogt, %50, %51 : vector<128x128xbf16>
    %cst_19 = arith.constant 1.000980e-02 : bf16
    %53 = vector.broadcast %cst_19 : bf16 to vector<128x128xbf16>
    %54 = arith.mulf %53, %50 : vector<128x128xbf16>
    %55 = arith.select %52, %50, %54 : vector<128x128xi1>, vector<128x128xbf16>
    %c0_20 = arith.constant 0 : index
    %c0_21 = arith.constant 0 : index
    %56 = vector.load %arg8[%c0_20, %c0_21] : memref<256x128xbf16, #tpu.memory_space<vmem>>, vector<256x128xbf16>
    %cst_22 = arith.constant dense<0.000000e+00> : vector<256x128xf32>
    %57 = tpu.matmul %56, %55, %cst_22 {dimension_numbers = #tpu.dot_dimension_numbers<[1], [0], [0], [1], [0, 0, 1, 1], [], []>} : vector<256x128xbf16>, vector<128x128xbf16>, vector<256x128xf32> -> vector<256x128xf32>
    %c0_23 = arith.constant 0 : index
    %c0_24 = arith.constant 0 : index
    %58 = vector.load %arg9[%c0_23, %c0_24] : memref<256x1xf32, #tpu.memory_space<vmem>>, vector<256x1xf32>
    %59 = vector.broadcast %58 : vector<256x1xf32> to vector<256x128xf32>
    %60 = arith.addf %57, %59 : vector<256x128xf32>
    %61 = arith.truncf %60 : vector<256x128xf32> to vector<256x128xbf16>
    %cst_25 = arith.constant 0.000000e+00 : bf16
    %62 = vector.broadcast %cst_25 : bf16 to vector<256x128xbf16>
    %63 = arith.cmpf ogt, %61, %62 : vector<256x128xbf16>
    %cst_26 = arith.constant 1.000980e-02 : bf16
    %64 = vector.broadcast %cst_26 : bf16 to vector<256x128xbf16>
    %65 = arith.mulf %64, %61 : vector<256x128xbf16>
    %66 = arith.select %63, %61, %65 : vector<256x128xi1>, vector<256x128xbf16>
    %c0_27 = arith.constant 0 : index
    %c0_28 = arith.constant 0 : index
    %67 = vector.load %arg10[%c0_27, %c0_28] : memref<256x256xbf16, #tpu.memory_space<vmem>>, vector<256x256xbf16>
    %cst_29 = arith.constant dense<0.000000e+00> : vector<256x128xf32>
    %68 = tpu.matmul %67, %66, %cst_29 {dimension_numbers = #tpu.dot_dimension_numbers<[1], [0], [0], [1], [0, 0, 1, 1], [], []>} : vector<256x256xbf16>, vector<256x128xbf16>, vector<256x128xf32> -> vector<256x128xf32>
    %c0_30 = arith.constant 0 : index
    %c0_31 = arith.constant 0 : index
    %69 = vector.load %arg11[%c0_30, %c0_31] : memref<256x1xf32, #tpu.memory_space<vmem>>, vector<256x1xf32>
    %70 = vector.broadcast %69 : vector<256x1xf32> to vector<256x128xf32>
    %71 = arith.addf %68, %70 : vector<256x128xf32>
    %72 = arith.truncf %71 : vector<256x128xf32> to vector<256x128xbf16>
    %cst_32 = arith.constant 0.000000e+00 : bf16
    %73 = vector.broadcast %cst_32 : bf16 to vector<256x128xbf16>
    %74 = arith.maximumf %72, %73 : vector<256x128xbf16>
    %75 = arith.extf %74 : vector<256x128xbf16> to vector<256x128xf32>
    %c0_33 = arith.constant 0 : index
    %c0_34 = arith.constant 0 : index
    %76 = vector.load %arg12[%c0_33, %c0_34] : memref<256x1xf32, #tpu.memory_space<vmem>>, vector<256x1xf32>
    %77 = vector.broadcast %76 : vector<256x1xf32> to vector<256x128xf32>
    %78 = arith.mulf %75, %77 : vector<256x128xf32>
    %cst_35 = arith.constant dense<0.000000e+00> : vector<128xf32>
    %79 = vector.multi_reduction <add>, %78, %cst_35 [0] : vector<256x128xf32> to vector<128xf32>
    %80 = vector.shape_cast %79 : vector<128xf32> to vector<1x128xf32>
    %c0_36 = arith.constant 0 : index
    %c0_37 = arith.constant 0 : index
    %81 = vector.load %arg13[%c0_36, %c0_37] : memref<1x1xf32, #tpu.memory_space<vmem>>, vector<1x1xf32>
    %82 = vector.broadcast %81 : vector<1x1xf32> to vector<1x128xf32>
    %83 = arith.addf %80, %82 : vector<1x128xf32>
    %cst_38 = arith.constant 0.000000e+00 : f32
    %84 = vector.broadcast %cst_38 : f32 to vector<1x128xf32>
    %85 = arith.subf %84, %83 : vector<1x128xf32>
    %86 = math.exp %85 : vector<1x128xf32>
    %cst_39 = arith.constant 1.000000e+00 : f32
    %87 = vector.broadcast %cst_39 : f32 to vector<1x128xf32>
    %88 = arith.addf %87, %86 : vector<1x128xf32>
    %89 = tpu.reciprocal %88 {approx = true} : vector<1x128xf32> -> vector<1x128xf32>
    %c0_40 = arith.constant 0 : index
    %c0_41 = arith.constant 0 : index
    %90 = vector.load %arg14[%c0_40, %c0_41] : memref<1x128xf32, #tpu.memory_space<vmem>>, vector<1x128xf32>
    tpu.vector_store %arg14[%c0_40, %c0_41], %89 {strides = array<i32>} : memref<1x128xf32, #tpu.memory_space<vmem>>, vector<1x128xf32>,
    return
  }
  func.func @transform_0(%arg0: i32) -> (i32, i32) {
    %c0_i32 = arith.constant 0 : i32
    %c0_i32_0 = arith.constant 0 : i32
    return %c0_i32, %arg0 : i32, i32
  }
  func.func @transform_1(%arg0: i32) -> (i32, i32) {
    %c0_i32 = arith.constant 0 : i32
    %c0_i32_0 = arith.constant 0 : i32
    %c0_i32_1 = arith.constant 0 : i32
    return %c0_i32, %c0_i32_0 : i32, i32
  }
  func.func @transform_2(%arg0: i32) -> (i32, i32) {
    %c0_i32 = arith.constant 0 : i32
    %c0_i32_0 = arith.constant 0 : i32
    %c0_i32_1 = arith.constant 0 : i32
    return %c0_i32, %c0_i32_0 : i32, i32
  }
  func.func @transform_3(%arg0: i32) -> (i32, i32) {
    %c0_i32 = arith.constant 0 : i32
    %c0_i32_0 = arith.constant 0 : i32
    %c0_i32_1 = arith.constant 0 : i32
    return %c0_i32, %c0_i32_0 : i32, i32
  }
  func.func @transform_4(%arg0: i32) -> (i32, i32) {
    %c0_i32 = arith.constant 0 : i32
    %c0_i32_0 = arith.constant 0 : i32
    %c0_i32_1 = arith.constant 0 : i32
    return %c0_i32, %c0_i32_0 : i32, i32
  }
  func.func @transform_5(%arg0: i32) -> (i32, i32) {
    %c0_i32 = arith.constant 0 : i32
    %c0_i32_0 = arith.constant 0 : i32
    %c0_i32_1 = arith.constant 0 : i32
    return %c0_i32, %c0_i32_0 : i32, i32
  }
  func.func @transform_6(%arg0: i32) -> (i32, i32) {
    %c0_i32 = arith.constant 0 : i32
    %c0_i32_0 = arith.constant 0 : i32
    %c0_i32_1 = arith.constant 0 : i32
    return %c0_i32, %c0_i32_0 : i32, i32
  }
  func.func @transform_7(%arg0: i32) -> (i32, i32) {
    %c0_i32 = arith.constant 0 : i32
    %c0_i32_0 = arith.constant 0 : i32
    %c0_i32_1 = arith.constant 0 : i32
    return %c0_i32, %c0_i32_0 : i32, i32
  }
  func.func @transform_8(%arg0: i32) -> (i32, i32) {
    %c0_i32 = arith.constant 0 : i32
    %c0_i32_0 = arith.constant 0 : i32
    %c0_i32_1 = arith.constant 0 : i32
    return %c0_i32, %c0_i32_0 : i32, i32
  }
  func.func @transform_9(%arg0: i32) -> (i32, i32) {
    %c0_i32 = arith.constant 0 : i32
    %c0_i32_0 = arith.constant 0 : i32
    %c0_i32_1 = arith.constant 0 : i32
    return %c0_i32, %c0_i32_0 : i32, i32
  }
  func.func @transform_10(%arg0: i32) -> (i32, i32) {
    %c0_i32 = arith.constant 0 : i32
    %c0_i32_0 = arith.constant 0 : i32
    %c0_i32_1 = arith.constant 0 : i32
    return %c0_i32, %c0_i32_0 : i32, i32
  }
  func.func @transform_11(%arg0: i32) -> (i32, i32) {
    %c0_i32 = arith.constant 0 : i32
    %c0_i32_0 = arith.constant 0 : i32
    %c0_i32_1 = arith.constant 0 : i32
    return %c0_i32, %c0_i32_0 : i32, i32
  }
  func.func @transform_12(%arg0: i32) -> (i32, i32) {
    %c0_i32 = arith.constant 0 : i32
    %c0_i32_0 = arith.constant 0 : i32
    %c0_i32_1 = arith.constant 0 : i32
    return %c0_i32, %c0_i32_0 : i32, i32
  }
  func.func @transform_13(%arg0: i32) -> (i32, i32) {
    %c0_i32 = arith.constant 0 : i32
    %c0_i32_0 = arith.constant 0 : i32
    return %c0_i32, %arg0 : i32, i32
  }
}

</mosaic_0001>

<llo_original>
// kernel: discriminator_forward.1
$region0: #{discriminator_forward.1}
  #allocation0 [shape = 'u32[]', space=smem, size = 0x4, offset = 0x4, fixed_abs, tag = 'smem constant byte address 0x4 - core index']
  #allocation1 [shape = 'u32[144,128]{1,0:T(1,128)}', space=vmem, size = 0x12000, scoped, tag = 'internal scratch']
  #allocation2 [shape = 'f32[1,1]{1,0:T(1,128)S(1)}', space=vmem, size = 0x200, scoped, tag = 'scoped memory for discriminator_forward.1']
  %s0 = inlined_call_operand.vmem [shape: f32[4,128], index: 0, kind: input, shape index: {}]
  %s1 = inlined_call_operand.vmem [shape: f32[32,4], index: 1, kind: input, shape index: {}]
  %s2 = inlined_call_operand.vmem [shape: f32[32,1], index: 2, kind: input, shape index: {}]
  %s3 = inlined_call_operand.vmem [shape: bf16[64,32], index: 3, kind: input, shape index: {}]
  %s4 = inlined_call_operand.vmem [shape: f32[64,1], index: 4, kind: input, shape index: {}]
  %s5 = inlined_call_operand.vmem [shape: bf16[128,64], index: 5, kind: input, shape index: {}]
  %s6 = inlined_call_operand.vmem [shape: f32[128,1], index: 6, kind: input, shape index: {}]
  %s7 = inlined_call_operand.vmem [shape: bf16[256,128], index: 7, kind: input, shape index: {}]
  %s8 = inlined_call_operand.vmem [shape: f32[256,1], index: 8, kind: input, shape index: {}]
  %s9 = inlined_call_operand.vmem [shape: bf16[256,256], index: 9, kind: input, shape index: {}]
  %s10 = inlined_call_operand.vmem [shape: f32[256,1], index: 10, kind: input, shape index: {}]
  %s11 = inlined_call_operand.vmem [shape: f32[256,1], index: 11, kind: input, shape index: {}]
  %s12 = inlined_call_operand.<no memory space> [shape: f32[1,1], index: 12, kind: input, shape index: {}]
  %s13 = inlined_call_operand.vmem [shape: f32[1,128], index: 13, kind: output, shape index: {}]
  %s14 = sld [smem:[#allocation0]]
  $region62: #{discriminator_forward.1} parent=0
    _
  %s16 = ssub.s32 1, %s14
  %s17 = scalar_select 0, %s16, %s14
  %v18 = vstv %s12
  %19 = vst [vmem:[#allocation2] sm:$0x1] %v18
  // Predicated region
  $region2: #{discriminator_forward.1} parent=0 // pred_check
    _
  $region3: #{discriminator_forward.1} parent=0 // pred_check_branch
    %21 = sbr.rel (0) target = $region5
  $region4: #{discriminator_forward.1} parent=0 // pred_region
    _
  $region5: #{discriminator_forward.1} parent=0 // pred_fallthru
    _
  // Predicated region
  $region6: #{discriminator_forward.1} parent=0 // pred_check
    _
  $region7: #{discriminator_forward.1} parent=0 // pred_check_branch
    %23 = sbr.rel (0) target = $region9
  $region8: #{discriminator_forward.1} parent=0 // pred_region
    _
  $region9: #{discriminator_forward.1} parent=0 // pred_fallthru
    _
  // Predicated region
  $region10: #{discriminator_forward.1} parent=0 // pred_check
    _
  $region11: #{discriminator_forward.1} parent=0 // pred_check_branch
    %25 = sbr.rel (0) target = $region13
  $region12: #{discriminator_forward.1} parent=0 // pred_region
    _
  $region13: #{discriminator_forward.1} parent=0 // pred_fallthru
    _
  // Predicated region
  $region14: #{discriminator_forward.1} parent=0 // pred_check
    _
  $region15: #{discriminator_forward.1} parent=0 // pred_check_branch
    %27 = sbr.rel (0) target = $region17
  $region16: #{discriminator_forward.1} parent=0 // pred_region
    _
  $region17: #{discriminator_forward.1} parent=0 // pred_fallthru
    _
  // Predicated region
  $region18: #{discriminator_forward.1} parent=0 // pred_check
    _
  $region19: #{discriminator_forward.1} parent=0 // pred_check_branch
    %29 = sbr.rel (0) target = $region21
  $region20: #{discriminator_forward.1} parent=0 // pred_region
    _
  $region21: #{discriminator_forward.1} parent=0 // pred_fallthru
    _
  // Predicated region
  $region22: #{discriminator_forward.1} parent=0 // pred_check
    _
  $region23: #{discriminator_forward.1} parent=0 // pred_check_branch
    %31 = sbr.rel (0) target = $region25
  $region24: #{discriminator_forward.1} parent=0 // pred_region
    _
  $region25: #{discriminator_forward.1} parent=0 // pred_fallthru
    _
  // Predicated region
  $region26: #{discriminator_forward.1} parent=0 // pred_check
    _
  $region27: #{discriminator_forward.1} parent=0 // pred_check_branch
    %33 = sbr.rel (0) target = $region29
  $region28: #{discriminator_forward.1} parent=0 // pred_region
    _
  $region29: #{discriminator_forward.1} parent=0 // pred_fallthru
    _
  // Predicated region
  $region30: #{discriminator_forward.1} parent=0 // pred_check
    _
  $region31: #{discriminator_forward.1} parent=0 // pred_check_branch
    %35 = sbr.rel (0) target = $region33
  $region32: #{discriminator_forward.1} parent=0 // pred_region
    _
  $region33: #{discriminator_forward.1} parent=0 // pred_fallthru
    _
  // Predicated region
  $region34: #{discriminator_forward.1} parent=0 // pred_check
    _
  $region35: #{discriminator_forward.1} parent=0 // pred_check_branch
    %37 = sbr.rel (0) target = $region37
  $region36: #{discriminator_forward.1} parent=0 // pred_region
    _
  $region37: #{discriminator_forward.1} parent=0 // pred_fallthru
    _
  // Predicated region
  $region38: #{discriminator_forward.1} parent=0 // pred_check
    _
  $region39: #{discriminator_forward.1} parent=0 // pred_check_branch
    %39 = sbr.rel (0) target = $region41
  $region40: #{discriminator_forward.1} parent=0 // pred_region
    _
  $region41: #{discriminator_forward.1} parent=0 // pred_fallthru
    _
  // Predicated region
  $region42: #{discriminator_forward.1} parent=0 // pred_check
    _
  $region43: #{discriminator_forward.1} parent=0 // pred_check_branch
    %41 = sbr.rel (0) target = $region45
  $region44: #{discriminator_forward.1} parent=0 // pred_region
    _
  $region45: #{discriminator_forward.1} parent=0 // pred_fallthru
    _
  // Predicated region
  $region46: #{discriminator_forward.1} parent=0 // pred_check
    _
  $region47: #{discriminator_forward.1} parent=0 // pred_check_branch
    %43 = sbr.rel (0) target = $region49
  $region48: #{discriminator_forward.1} parent=0 // pred_region
    _
  $region49: #{discriminator_forward.1} parent=0 // pred_fallthru
    _
  // Predicated region
  $region50: #{discriminator_forward.1} parent=0 // pred_check
    _
  $region51: #{discriminator_forward.1} parent=0 // pred_check_branch
    %45 = sbr.rel (0) target = $region53
  $region52: #{discriminator_forward.1} parent=0 // pred_region
    _
  $region53: #{discriminator_forward.1} parent=0 // pred_fallthru
    _
  %v48 = vld [vmem:[%s0] sm:$0xf]
  %v49 = vld [vmem:[%s1] sm:$0xff]
  %v50 = vld [vmem:[%s1 + $0x8] sm:$0xff]
  %v51 = vld [vmem:[%s1 + $0x10] sm:$0xff]
  %v52 = vld [vmem:[%s1 + $0x18] sm:$0xff]
  %v53 = vld [vmem:[%s2] sm:$0xff]
  %v54 = vld [vmem:[%s2 + $0x8] sm:$0xff]
  %v55 = vld [vmem:[%s2 + $0x10] sm:$0xff]
  %v56 = vld [vmem:[%s2 + $0x18] sm:$0xff]
  %58 = vset.pattern.permute.xlu0 0
  %59 = vperm.xlu0 %58, %v49
  %v60 = vpop.permute.xlu0 %59
  %63 = vset.pattern.permute.xlu0 0
  %64 = vperm.xlu0 %63, %v50
  %v65 = vpop.permute.xlu0 %64
  %68 = vset.pattern.permute.xlu0 0
  %69 = vperm.xlu0 %68, %v51
  %v70 = vpop.permute.xlu0 %69
  %73 = vset.pattern.permute.xlu0 0
  %74 = vperm.xlu0 %73, %v52
  %v75 = vpop.permute.xlu0 %74
  %v77 = vlaneseq
  %v78 = vshrl.u32 %v77, 7
  %v79 = vsub.s32 0, %v78
  %v80 = vrot.slane %v48, %v79
  %v81 = vmul.f32 %v60, %v80
  %v82 = vmul.f32 %v65, %v80
  %v83 = vmul.f32 %v70, %v80
  %v84 = vmul.f32 %v75, %v80
  %86 = vset.pattern.permute.xlu0 0
  %87 = vperm.xlu0 %86, %v53
  %v88 = vpop.permute.xlu0 %87
  %91 = vset.pattern.permute.xlu0 0
  %92 = vperm.xlu0 %91, %v54
  %v93 = vpop.permute.xlu0 %92
  %96 = vset.pattern.permute.xlu0 0
  %97 = vperm.xlu0 %96, %v55
  %v98 = vpop.permute.xlu0 %97
  %101 = vset.pattern.permute.xlu0 0
  %102 = vperm.xlu0 %101, %v56
  %v103 = vpop.permute.xlu0 %102
  %v105 = vadd.f32 %v88, %v81
  %v106 = vadd.f32 %v93, %v82
  %v107 = vadd.f32 %v98, %v83
  %v108 = vadd.f32 %v103, %v84
  %109 = vset.pattern.permute.xlu0 1
  %110 = vperm.xlu0 %109, %v49
  %v111 = vpop.permute.xlu0 %110
  %113 = vset.pattern.permute.xlu0 1
  %114 = vperm.xlu0 %113, %v50
  %v115 = vpop.permute.xlu0 %114
  %117 = vset.pattern.permute.xlu0 1
  %118 = vperm.xlu0 %117, %v51
  %v119 = vpop.permute.xlu0 %118
  %121 = vset.pattern.permute.xlu0 1
  %122 = vperm.xlu0 %121, %v52
  %v123 = vpop.permute.xlu0 %122
  %v125 = vlaneseq
  %v126 = vshrl.u32 %v125, 7
  %v127 = vsub.s32 1, %v126
  %v128 = vrot.slane %v48, %v127
  %v129 = vmul.f32 %v111, %v128
  %v130 = vmul.f32 %v115, %v128
  %v131 = vmul.f32 %v119, %v128
  %v132 = vmul.f32 %v123, %v128
  %v133 = vadd.f32 %v105, %v129
  %v134 = vadd.f32 %v106, %v130
  %v135 = vadd.f32 %v107, %v131
  %v136 = vadd.f32 %v108, %v132
  %137 = vset.pattern.permute.xlu0 2
  %138 = vperm.xlu0 %137, %v49
  %v139 = vpop.permute.xlu0 %138
  %141 = vset.pattern.permute.xlu0 2
  %142 = vperm.xlu0 %141, %v50
  %v143 = vpop.permute.xlu0 %142
  %145 = vset.pattern.permute.xlu0 2
  %146 = vperm.xlu0 %145, %v51
  %v147 = vpop.permute.xlu0 %146
  %149 = vset.pattern.permute.xlu0 2
  %150 = vperm.xlu0 %149, %v52
  %v151 = vpop.permute.xlu0 %150
  %v153 = vlaneseq
  %v154 = vshrl.u32 %v153, 7
  %v155 = vsub.s32 2, %v154
  %v156 = vrot.slane %v48, %v155
  %v157 = vmul.f32 %v139, %v156
  %v158 = vmul.f32 %v143, %v156
  %v159 = vmul.f32 %v147, %v156
  %v160 = vmul.f32 %v151, %v156
  %v161 = vadd.f32 %v133, %v157
  %v162 = vadd.f32 %v134, %v158
  %v163 = vadd.f32 %v135, %v159
  %v164 = vadd.f32 %v136, %v160
  %165 = vset.pattern.permute.xlu0 3
  %166 = vperm.xlu0 %165, %v49
  %v167 = vpop.permute.xlu0 %166
  %169 = vset.pattern.permute.xlu0 3
  %170 = vperm.xlu0 %169, %v50
  %v171 = vpop.permute.xlu0 %170
  %173 = vset.pattern.permute.xlu0 3
  %174 = vperm.xlu0 %173, %v51
  %v175 = vpop.permute.xlu0 %174
  %177 = vset.pattern.permute.xlu0 3
  %178 = vperm.xlu0 %177, %v52
  %v179 = vpop.permute.xlu0 %178
  %v181 = vlaneseq
  %v182 = vshrl.u32 %v181, 7
  %v183 = vsub.s32 3, %v182
  %v184 = vrot.slane %v48, %v183
  %v185 = vmul.f32 %v167, %v184
  %v186 = vmul.f32 %v171, %v184
  %v187 = vmul.f32 %v175, %v184
  %v188 = vmul.f32 %v179, %v184
  %v189 = vadd.f32 %v161, %v185
  %v190 = vadd.f32 %v162, %v186
  %v191 = vadd.f32 %v163, %v187
  %v192 = vadd.f32 %v164, %v188
  %vm193 = vcmp.gt.f32.partialorder %v189, 0.0
  %vm194 = vcmp.gt.f32.partialorder %v190, 0.0
  %vm195 = vcmp.gt.f32.partialorder %v191, 0.0
  %vm196 = vcmp.gt.f32.partialorder %v192, 0.0
  %v197 = vmul.f32 %v189, 0.01
  %v198 = vmul.f32 %v190, 0.01
  %v199 = vmul.f32 %v191, 0.01
  %v200 = vmul.f32 %v192, 0.01
  %v201 = vsel %vm193, %v189, %v197
  %v202 = vsel %vm194, %v190, %v198
  %v203 = vsel %vm195, %v191, %v199
  %v204 = vsel %vm196, %v192, %v200
  %v205 = vpack.c.bf16 %v202, %v201
  %v206 = vpack.c.bf16 %v204, %v203
  %v207 = vld [vmem:[%s3] sm:$0xf]
  %v208 = vld [vmem:[%s3 + $0x4] sm:$0xf]
  %v209 = vld [vmem:[%s3 + $0x8] sm:$0xf]
  %v210 = vld [vmem:[%s3 + $0xc] sm:$0xf]
  %v211 = vld [vmem:[%s3 + $0x10] sm:$0xf]
  %v212 = vld [vmem:[%s3 + $0x14] sm:$0xf]
  %v213 = vld [vmem:[%s3 + $0x18] sm:$0xf]
  %v214 = vld [vmem:[%s3 + $0x1c] sm:$0xf]
  %v215 = vld [vmem:[%s4] sm:$0xff]
  %v216 = vld [vmem:[%s4 + $0x8] sm:$0xff]
  %v217 = vld [vmem:[%s4 + $0x10] sm:$0xff]
  %v218 = vld [vmem:[%s4 + $0x18] sm:$0xff]
  %v219 = vld [vmem:[%s4 + $0x20] sm:$0xff]
  %v220 = vld [vmem:[%s4 + $0x28] sm:$0xff]
  %v221 = vld [vmem:[%s4 + $0x30] sm:$0xff]
  %v222 = vld [vmem:[%s4 + $0x38] sm:$0xff]
  %224 = vset.pattern.permute.xlu0 0
  %225 = vperm.xlu0 %224, %v215
  %v226 = vpop.permute.xlu0 %225
  %229 = vset.pattern.permute.xlu0 0
  %230 = vperm.xlu0 %229, %v216
  %v231 = vpop.permute.xlu0 %230
  %234 = vset.pattern.permute.xlu0 0
  %235 = vperm.xlu0 %234, %v217
  %v236 = vpop.permute.xlu0 %235
  %239 = vset.pattern.permute.xlu0 0
  %240 = vperm.xlu0 %239, %v218
  %v241 = vpop.permute.xlu0 %240
  %244 = vset.pattern.permute.xlu0 0
  %245 = vperm.xlu0 %244, %v219
  %v246 = vpop.permute.xlu0 %245
  %249 = vset.pattern.permute.xlu0 0
  %250 = vperm.xlu0 %249, %v220
  %v251 = vpop.permute.xlu0 %250
  %254 = vset.pattern.permute.xlu0 0
  %255 = vperm.xlu0 %254, %v221
  %v256 = vpop.permute.xlu0 %255
  %259 = vset.pattern.permute.xlu0 0
  %260 = vperm.xlu0 %259, %v222
  %v261 = vpop.permute.xlu0 %260
  %v271 = vunpack.c.l.b16 %v207
  %v272 = vunpack.c.l.b16 %v208
  %v273 = vunpack.c.l.b16 %v209
  %v274 = vunpack.c.l.b16 %v210
  %v275 = vunpack.c.l.b16 %v211
  %v276 = vunpack.c.l.b16 %v212
  %v277 = vunpack.c.l.b16 %v213
  %v278 = vunpack.c.l.b16 %v214
  %v279 = vpack.c.b16 %v272, %v271
  %v280 = vpack.c.b16 %v274, %v273
  %v281 = vpack.c.b16 %v276, %v275
  %v282 = vpack.c.b16 %v278, %v277
  %vm283 = vcmask 261120
  %v285 = vsel %vm283, %v279, 0
  %v288 = vsel %vm283, %v280, 0
  %v291 = vsel %vm283, %v281, 0
  %v294 = vsel %vm283, %v282, 0
  %296 = vmatprep.subr.bf16.mxu0 0
  %297 = vmatpush1.bf16.msra.mxu0 %v205
  %298 = vmatprep.subr.bf16.mxu0 0
  %299 = vmatpush1.bf16.msra.mxu0 %v206
  %300 = vmatprep.subr.bf16.mxu0 0
  %301 = vmatpush1.bf16.msra.mxu0 0
  %302 = vmatprep.subr.bf16.mxu0 0
  %303 = vmatpush1.bf16.msra.mxu0 0
  %304 = vmatprep.subr.bf16.mxu0 0
  %305 = vmatpush1.bf16.msra.mxu0 0
  %306 = vmatprep.subr.bf16.mxu0 0
  %307 = vmatpush1.bf16.msra.mxu0 0
  %308 = vmatprep.subr.bf16.mxu0 0
  %309 = vmatpush1.bf16.msra.mxu0 0
  %310 = vmatprep.subr.bf16.mxu0 0
  %311 = vmatpush1.bf16.msra.mxu0 0
  %312 = vmatprep.subr.bf16.mxu0 0
  %313 = vmatpush1.bf16.msra.mxu0 0
  %314 = vmatprep.subr.bf16.mxu0 0
  %315 = vmatpush1.bf16.msra.mxu0 0
  %316 = vmatprep.subr.bf16.mxu0 0
  %317 = vmatpush1.bf16.msra.mxu0 0
  %318 = vmatprep.subr.bf16.mxu0 0
  %319 = vmatpush1.bf16.msra.mxu0 0
  %320 = vmatprep.subr.bf16.mxu0 0
  %321 = vmatpush1.bf16.msra.mxu0 0
  %322 = vmatprep.subr.bf16.mxu0 0
  %323 = vmatpush1.bf16.msra.mxu0 0
  %324 = vmatprep.subr.bf16.mxu0 0
  %325 = vmatpush1.bf16.msra.mxu0 0
  %326 = vmatprep.subr.bf16.mxu0 0
  %327 = vmatpush1.bf16.msra.mxu0 0
  %328 = vmatprep.mubr.bf16.mxu0 0
  %329 = vmatmul.mubr.bf16.gmra.mrb[0].mxu0 %v285
  %v330 = vpop.f32.mrb[0].mxu0
  %v331 = vadd.f32 %v226, %v330
  %v332 = vpop.f32.mrb[0].mxu0
  %v333 = vpop.f32.mrb[0].mxu0
  %v334 = vadd.f32 %v231, %v333
  %v335 = vpop.f32.mrb[0].mxu0
  %336 = vmatprep.mubr.bf16.mxu0 0
  %337 = vmatmul.mubr.bf16.gmra.mrb[0].mxu0 %v288
  %v338 = vpop.f32.mrb[0].mxu0
  %v339 = vadd.f32 %v236, %v338
  %v340 = vpop.f32.mrb[0].mxu0
  %v341 = vpop.f32.mrb[0].mxu0
  %v342 = vadd.f32 %v241, %v341
  %v343 = vpop.f32.mrb[0].mxu0
  %344 = vmatprep.mubr.bf16.mxu0 0
  %345 = vmatmul.mubr.bf16.gmra.mrb[0].mxu0 %v291
  %v346 = vpop.f32.mrb[0].mxu0
  %v347 = vadd.f32 %v246, %v346
  %v348 = vpop.f32.mrb[0].mxu0
  %v349 = vpop.f32.mrb[0].mxu0
  %v350 = vadd.f32 %v251, %v349
  %v351 = vpop.f32.mrb[0].mxu0
  %352 = vmatprep.mubr.bf16.mxu0 0
  %353 = vmatmul.mubr.bf16.gmra.mrb[0].mxu0 %v294
  %v354 = vpop.f32.mrb[0].mxu0
  %v355 = vadd.f32 %v256, %v354
  %v356 = vpop.f32.mrb[0].mxu0
  %v357 = vpop.f32.mrb[0].mxu0
  %v358 = vadd.f32 %v261, %v357
  %v359 = vpop.f32.mrb[0].mxu0
  %360 = vdwg.mxu0
  %v361 = vpack.c.bf16 %v334, %v331
  %v362 = vpack.c.bf16 %v342, %v339
  %v363 = vpack.c.bf16 %v350, %v347
  %v364 = vpack.c.bf16 %v358, %v355
  %vm365 = vcmp.gt.bf16.partialorder %v361, 0
  %vm366 = vcmp.gt.bf16.partialorder %v362, 0
  %vm367 = vcmp.gt.bf16.partialorder %v363, 0
  %vm368 = vcmp.gt.bf16.partialorder %v364, 0
  %v369 = vmul.bf16 %v361, 1009007652
  %v370 = vmul.bf16 %v362, 1009007652
  %v371 = vmul.bf16 %v363, 1009007652
  %v372 = vmul.bf16 %v364, 1009007652
  %v373 = vsel %vm365, %v361, %v369
  %v374 = vsel %vm366, %v362, %v370
  %v375 = vsel %vm367, %v363, %v371
  %v376 = vsel %vm368, %v364, %v372
  %v377 = vld [vmem:[%s5] sm:$0xf]
  %v378 = vld [vmem:[%s5 + $0x4] sm:$0xf]
  %v379 = vld [vmem:[%s5 + $0x8] sm:$0xf]
  %v380 = vld [vmem:[%s5 + $0xc] sm:$0xf]
  %v381 = vld [vmem:[%s5 + $0x10] sm:$0xf]
  %v382 = vld [vmem:[%s5 + $0x14] sm:$0xf]
  %v383 = vld [vmem:[%s5 + $0x18] sm:$0xf]
  %v384 = vld [vmem:[%s5 + $0x1c] sm:$0xf]
  %v385 = vld [vmem:[%s5 + $0x20] sm:$0xf]
  %v386 = vld [vmem:[%s5 + $0x24] sm:$0xf]
  %v387 = vld [vmem:[%s5 + $0x28] sm:$0xf]
  %v388 = vld [vmem:[%s5 + $0x2c] sm:$0xf]
  %v389 = vld [vmem:[%s5 + $0x30] sm:$0xf]
  %v390 = vld [vmem:[%s5 + $0x34] sm:$0xf]
  %v391 = vld [vmem:[%s5 + $0x38] sm:$0xf]
  %v392 = vld [vmem:[%s5 + $0x3c] sm:$0xf]
  %v393 = vld [vmem:[%s6] sm:$0xff]
  %v394 = vld [vmem:[%s6 + $0x8] sm:$0xff]
  %v395 = vld [vmem:[%s6 + $0x10] sm:$0xff]
  %v396 = vld [vmem:[%s6 + $0x18] sm:$0xff]
  %v397 = vld [vmem:[%s6 + $0x20] sm:$0xff]
  %v398 = vld [vmem:[%s6 + $0x28] sm:$0xff]
  %v399 = vld [vmem:[%s6 + $0x30] sm:$0xff]
  %v400 = vld [vmem:[%s6 + $0x38] sm:$0xff]
  %v401 = vld [vmem:[%s6 + $0x40] sm:$0xff]
  %v402 = vld [vmem:[%s6 + $0x48] sm:$0xff]
  %v403 = vld [vmem:[%s6 + $0x50] sm:$0xff]
  %v404 = vld [vmem:[%s6 + $0x58] sm:$0xff]
  %v405 = vld [vmem:[%s6 + $0x60] sm:$0xff]
  %v406 = vld [vmem:[%s6 + $0x68] sm:$0xff]
  %v407 = vld [vmem:[%s6 + $0x70] sm:$0xff]
  %v408 = vld [vmem:[%s6 + $0x78] sm:$0xff]
  %410 = vset.pattern.permute.xlu0 0
  %411 = vperm.xlu0 %410, %v393
  %v412 = vpop.permute.xlu0 %411
  %415 = vset.pattern.permute.xlu0 0
  %416 = vperm.xlu0 %415, %v394
  %v417 = vpop.permute.xlu0 %416
  %420 = vset.pattern.permute.xlu0 0
  %421 = vperm.xlu0 %420, %v395
  %v422 = vpop.permute.xlu0 %421
  %425 = vset.pattern.permute.xlu0 0
  %426 = vperm.xlu0 %425, %v396
  %v427 = vpop.permute.xlu0 %426
  %430 = vset.pattern.permute.xlu0 0
  %431 = vperm.xlu0 %430, %v397
  %v432 = vpop.permute.xlu0 %431
  %435 = vset.pattern.permute.xlu0 0
  %436 = vperm.xlu0 %435, %v398
  %v437 = vpop.permute.xlu0 %436
  %440 = vset.pattern.permute.xlu0 0
  %441 = vperm.xlu0 %440, %v399
  %v442 = vpop.permute.xlu0 %441
  %445 = vset.pattern.permute.xlu0 0
  %446 = vperm.xlu0 %445, %v400
  %v447 = vpop.permute.xlu0 %446
  %450 = vset.pattern.permute.xlu0 0
  %451 = vperm.xlu0 %450, %v401
  %v452 = vpop.permute.xlu0 %451
  %455 = vset.pattern.permute.xlu0 0
  %456 = vperm.xlu0 %455, %v402
  %v457 = vpop.permute.xlu0 %456
  %460 = vset.pattern.permute.xlu0 0
  %461 = vperm.xlu0 %460, %v403
  %v462 = vpop.permute.xlu0 %461
  %465 = vset.pattern.permute.xlu0 0
  %466 = vperm.xlu0 %465, %v404
  %v467 = vpop.permute.xlu0 %466
  %470 = vset.pattern.permute.xlu0 0
  %471 = vperm.xlu0 %470, %v405
  %v472 = vpop.permute.xlu0 %471
  %475 = vset.pattern.permute.xlu0 0
  %476 = vperm.xlu0 %475, %v406
  %v477 = vpop.permute.xlu0 %476
  %480 = vset.pattern.permute.xlu0 0
  %481 = vperm.xlu0 %480, %v407
  %v482 = vpop.permute.xlu0 %481
  %485 = vset.pattern.permute.xlu0 0
  %486 = vperm.xlu0 %485, %v408
  %v487 = vpop.permute.xlu0 %486
  %v505 = vunpack.c.l.b16 %v377
  %v506 = vunpack.c.l.b16 %v378
  %v507 = vunpack.c.l.b16 %v379
  %v508 = vunpack.c.l.b16 %v380
  %v509 = vunpack.c.l.b16 %v381
  %v510 = vunpack.c.l.b16 %v382
  %v511 = vunpack.c.l.b16 %v383
  %v512 = vunpack.c.l.b16 %v384
  %v513 = vunpack.c.l.b16 %v385
  %v514 = vunpack.c.l.b16 %v386
  %v515 = vunpack.c.l.b16 %v387
  %v516 = vunpack.c.l.b16 %v388
  %v517 = vunpack.c.l.b16 %v389
  %v518 = vunpack.c.l.b16 %v390
  %v519 = vunpack.c.l.b16 %v391
  %v520 = vunpack.c.l.b16 %v392
  %v521 = vpack.c.b16 %v506, %v505
  %v522 = vpack.c.b16 %v508, %v507
  %v523 = vpack.c.b16 %v510, %v509
  %v524 = vpack.c.b16 %v512, %v511
  %v525 = vpack.c.b16 %v514, %v513
  %v526 = vpack.c.b16 %v516, %v515
  %v527 = vpack.c.b16 %v518, %v517
  %v528 = vpack.c.b16 %v520, %v519
  %vm529 = vcmask 523264
  %v531 = vsel %vm529, %v521, 0
  %v534 = vsel %vm529, %v522, 0
  %v537 = vsel %vm529, %v523, 0
  %v540 = vsel %vm529, %v524, 0
  %v543 = vsel %vm529, %v525, 0
  %v546 = vsel %vm529, %v526, 0
  %v549 = vsel %vm529, %v527, 0
  %v552 = vsel %vm529, %v528, 0
  %554 = vmatprep.subr.bf16.mxu0 0
  %555 = vmatpush1.bf16.msra.mxu0 %v373
  %556 = vmatprep.subr.bf16.mxu0 0
  %557 = vmatpush1.bf16.msra.mxu0 %v374
  %558 = vmatprep.subr.bf16.mxu0 0
  %559 = vmatpush1.bf16.msra.mxu0 %v375
  %560 = vmatprep.subr.bf16.mxu0 0
  %561 = vmatpush1.bf16.msra.mxu0 %v376
  %562 = vmatprep.subr.bf16.mxu0 0
  %563 = vmatpush1.bf16.msra.mxu0 0
  %564 = vmatprep.subr.bf16.mxu0 0
  %565 = vmatpush1.bf16.msra.mxu0 0
  %566 = vmatprep.subr.bf16.mxu0 0
  %567 = vmatpush1.bf16.msra.mxu0 0
  %568 = vmatprep.subr.bf16.mxu0 0
  %569 = vmatpush1.bf16.msra.mxu0 0
  %570 = vmatprep.subr.bf16.mxu0 0
  %571 = vmatpush1.bf16.msra.mxu0 0
  %572 = vmatprep.subr.bf16.mxu0 0
  %573 = vmatpush1.bf16.msra.mxu0 0
  %574 = vmatprep.subr.bf16.mxu0 0
  %575 = vmatpush1.bf16.msra.mxu0 0
  %576 = vmatprep.subr.bf16.mxu0 0
  %577 = vmatpush1.bf16.msra.mxu0 0
  %578 = vmatprep.subr.bf16.mxu0 0
  %579 = vmatpush1.bf16.msra.mxu0 0
  %580 = vmatprep.subr.bf16.mxu0 0
  %581 = vmatpush1.bf16.msra.mxu0 0
  %582 = vmatprep.subr.bf16.mxu0 0
  %583 = vmatpush1.bf16.msra.mxu0 0
  %584 = vmatprep.subr.bf16.mxu0 0
  %585 = vmatpush1.bf16.msra.mxu0 0
  %586 = vmatprep.mubr.bf16.mxu0 0
  %587 = vmatmul.mubr.bf16.gmra.mrb[0].mxu0 %v531
  %v588 = vpop.f32.mrb[0].mxu0
  %v589 = vadd.f32 %v412, %v588
  %v590 = vpop.f32.mrb[0].mxu0
  %v591 = vpop.f32.mrb[0].mxu0
  %v592 = vadd.f32 %v417, %v591
  %v593 = vpop.f32.mrb[0].mxu0
  %594 = vmatprep.mubr.bf16.mxu0 0
  %595 = vmatmul.mubr.bf16.gmra.mrb[0].mxu0 %v534
  %v596 = vpop.f32.mrb[0].mxu0
  %v597 = vadd.f32 %v422, %v596
  %v598 = vpop.f32.mrb[0].mxu0
  %v599 = vpop.f32.mrb[0].mxu0
  %v600 = vadd.f32 %v427, %v599
  %v601 = vpop.f32.mrb[0].mxu0
  %602 = vmatprep.mubr.bf16.mxu0 0
  %603 = vmatmul.mubr.bf16.gmra.mrb[0].mxu0 %v537
  %v604 = vpop.f32.mrb[0].mxu0
  %v605 = vadd.f32 %v432, %v604
  %v606 = vpop.f32.mrb[0].mxu0
  %v607 = vpop.f32.mrb[0].mxu0
  %v608 = vadd.f32 %v437, %v607
  %v609 = vpop.f32.mrb[0].mxu0
  %610 = vmatprep.mubr.bf16.mxu0 0
  %611 = vmatmul.mubr.bf16.gmra.mrb[0].mxu0 %v540
  %v612 = vpop.f32.mrb[0].mxu0
  %v613 = vadd.f32 %v442, %v612
  %v614 = vpop.f32.mrb[0].mxu0
  %v615 = vpop.f32.mrb[0].mxu0
  %v616 = vadd.f32 %v447, %v615
  %v617 = vpop.f32.mrb[0].mxu0
  %618 = vmatprep.mubr.bf16.mxu0 0
  %619 = vmatmul.mubr.bf16.gmra.mrb[0].mxu0 %v543
  %v620 = vpop.f32.mrb[0].mxu0
  %v621 = vadd.f32 %v452, %v620
  %v622 = vpop.f32.mrb[0].mxu0
  %v623 = vpop.f32.mrb[0].mxu0
  %v624 = vadd.f32 %v457, %v623
  %v625 = vpop.f32.mrb[0].mxu0
  %626 = vmatprep.mubr.bf16.mxu0 0
  %627 = vmatmul.mubr.bf16.gmra.mrb[0].mxu0 %v546
  %v628 = vpop.f32.mrb[0].mxu0
  %v629 = vadd.f32 %v462, %v628
  %v630 = vpop.f32.mrb[0].mxu0
  %v631 = vpop.f32.mrb[0].mxu0
  %v632 = vadd.f32 %v467, %v631
  %v633 = vpop.f32.mrb[0].mxu0
  %634 = vmatprep.mubr.bf16.mxu0 0
  %635 = vmatmul.mubr.bf16.gmra.mrb[0].mxu0 %v549
  %v636 = vpop.f32.mrb[0].mxu0
  %v637 = vadd.f32 %v472, %v636
  %v638 = vpop.f32.mrb[0].mxu0
  %v639 = vpop.f32.mrb[0].mxu0
  %v640 = vadd.f32 %v477, %v639
  %v641 = vpop.f32.mrb[0].mxu0
  %642 = vmatprep.mubr.bf16.mxu0 0
  %643 = vmatmul.mubr.bf16.gmra.mrb[0].mxu0 %v552
  %v644 = vpop.f32.mrb[0].mxu0
  %v645 = vadd.f32 %v482, %v644
  %v646 = vpop.f32.mrb[0].mxu0
  %v647 = vpop.f32.mrb[0].mxu0
  %v648 = vadd.f32 %v487, %v647
  %v649 = vpop.f32.mrb[0].mxu0
  %650 = vdwg.mxu0
  %v651 = vpack.c.bf16 %v592, %v589
  %v652 = vpack.c.bf16 %v600, %v597
  %v653 = vpack.c.bf16 %v608, %v605
  %v654 = vpack.c.bf16 %v616, %v613
  %v655 = vpack.c.bf16 %v624, %v621
  %v656 = vpack.c.bf16 %v632, %v629
  %v657 = vpack.c.bf16 %v640, %v637
  %v658 = vpack.c.bf16 %v648, %v645
  %vm659 = vcmp.gt.bf16.partialorder %v651, 0
  %vm660 = vcmp.gt.bf16.partialorder %v652, 0
  %vm661 = vcmp.gt.bf16.partialorder %v653, 0
  %vm662 = vcmp.gt.bf16.partialorder %v654, 0
  %vm663 = vcmp.gt.bf16.partialorder %v655, 0
  %vm664 = vcmp.gt.bf16.partialorder %v656, 0
  %vm665 = vcmp.gt.bf16.partialorder %v657, 0
  %vm666 = vcmp.gt.bf16.partialorder %v658, 0
  %v667 = vmul.bf16 %v651, 1009007652
  %v668 = vmul.bf16 %v652, 1009007652
  %v669 = vmul.bf16 %v653, 1009007652
  %v670 = vmul.bf16 %v654, 1009007652
  %v671 = vmul.bf16 %v655, 1009007652
  %v672 = vmul.bf16 %v656, 1009007652
  %v673 = vmul.bf16 %v657, 1009007652
  %v674 = vmul.bf16 %v658, 1009007652
  %v675 = vsel %vm659, %v651, %v667
  %v676 = vsel %vm660, %v652, %v668
  %v677 = vsel %vm661, %v653, %v669
  %v678 = vsel %vm662, %v654, %v670
  %v679 = vsel %vm663, %v655, %v671
  %v680 = vsel %vm664, %v656, %v672
  %v681 = vsel %vm665, %v657, %v673
  %v682 = vsel %vm666, %v658, %v674
  %v683 = vld [vmem:[%s7] sm:$0xf]
  %v684 = vld [vmem:[%s7 + $0x4] sm:$0xf]
  %v685 = vld [vmem:[%s7 + $0x8] sm:$0xf]
  %v686 = vld [vmem:[%s7 + $0xc] sm:$0xf]
  %v687 = vld [vmem:[%s7 + $0x10] sm:$0xf]
  %v688 = vld [vmem:[%s7 + $0x14] sm:$0xf]
  %v689 = vld [vmem:[%s7 + $0x18] sm:$0xf]
  %v690 = vld [vmem:[%s7 + $0x1c] sm:$0xf]
  %v691 = vld [vmem:[%s7 + $0x20] sm:$0xf]
  %v692 = vld [vmem:[%s7 + $0x24] sm:$0xf]
  %v693 = vld [vmem:[%s7 + $0x28] sm:$0xf]
  %v694 = vld [vmem:[%s7 + $0x2c] sm:$0xf]
  %v695 = vld [vmem:[%s7 + $0x30] sm:$0xf]
  %v696 = vld [vmem:[%s7 + $0x34] sm:$0xf]
  %v697 = vld [vmem:[%s7 + $0x38] sm:$0xf]
  %v698 = vld [vmem:[%s7 + $0x3c] sm:$0xf]
  %v699 = vld [vmem:[%s7 + $0x40] sm:$0xf]
  %v700 = vld [vmem:[%s7 + $0x44] sm:$0xf]
  %v701 = vld [vmem:[%s7 + $0x48] sm:$0xf]
  %v702 = vld [vmem:[%s7 + $0x4c] sm:$0xf]
  %v703 = vld [vmem:[%s7 + $0x50] sm:$0xf]
  %v704 = vld [vmem:[%s7 + $0x54] sm:$0xf]
  %v705 = vld [vmem:[%s7 + $0x58] sm:$0xf]
  %v706 = vld [vmem:[%s7 + $0x5c] sm:$0xf]
  %v707 = vld [vmem:[%s7 + $0x60] sm:$0xf]
  %v708 = vld [vmem:[%s7 + $0x64] sm:$0xf]
  %v709 = vld [vmem:[%s7 + $0x68] sm:$0xf]
  %v710 = vld [vmem:[%s7 + $0x6c] sm:$0xf]
  %v711 = vld [vmem:[%s7 + $0x70] sm:$0xf]
  %v712 = vld [vmem:[%s7 + $0x74] sm:$0xf]
  %v713 = vld [vmem:[%s7 + $0x78] sm:$0xf]
  %v714 = vld [vmem:[%s7 + $0x7c] sm:$0xf]
  %v715 = vld [vmem:[%s8] sm:$0xff]
  %v716 = vld [vmem:[%s8 + $0x8] sm:$0xff]
  %v717 = vld [vmem:[%s8 + $0x10] sm:$0xff]
  %v718 = vld [vmem:[%s8 + $0x18] sm:$0xff]
  %v719 = vld [vmem:[%s8 + $0x20] sm:$0xff]
  %v720 = vld [vmem:[%s8 + $0x28] sm:$0xff]
  %v721 = vld [vmem:[%s8 + $0x30] sm:$0xff]
  %v722 = vld [vmem:[%s8 + $0x38] sm:$0xff]
  %v723 = vld [vmem:[%s8 + $0x40] sm:$0xff]
  %v724 = vld [vmem:[%s8 + $0x48] sm:$0xff]
  %v725 = vld [vmem:[%s8 + $0x50] sm:$0xff]
  %v726 = vld [vmem:[%s8 + $0x58] sm:$0xff]
  %v727 = vld [vmem:[%s8 + $0x60] sm:$0xff]
  %v728 = vld [vmem:[%s8 + $0x68] sm:$0xff]
  %v729 = vld [vmem:[%s8 + $0x70] sm:$0xff]
  %v730 = vld [vmem:[%s8 + $0x78] sm:$0xff]
  %v731 = vld [vmem:[%s8 + $0x80] sm:$0xff]
  %v732 = vld [vmem:[%s8 + $0x88] sm:$0xff]
  %v733 = vld [vmem:[%s8 + $0x90] sm:$0xff]
  %v734 = vld [vmem:[%s8 + $0x98] sm:$0xff]
  %v735 = vld [vmem:[%s8 + $0xa0] sm:$0xff]
  %v736 = vld [vmem:[%s8 + $0xa8] sm:$0xff]
  %v737 = vld [vmem:[%s8 + $0xb0] sm:$0xff]
  %v738 = vld [vmem:[%s8 + $0xb8] sm:$0xff]
  %v739 = vld [vmem:[%s8 + $0xc0] sm:$0xff]
  %v740 = vld [vmem:[%s8 + $0xc8] sm:$0xff]
  %v741 = vld [vmem:[%s8 + $0xd0] sm:$0xff]
  %v742 = vld [vmem:[%s8 + $0xd8] sm:$0xff]
  %v743 = vld [vmem:[%s8 + $0xe0] sm:$0xff]
  %v744 = vld [vmem:[%s8 + $0xe8] sm:$0xff]
  %v745 = vld [vmem:[%s8 + $0xf0] sm:$0xff]
  %v746 = vld [vmem:[%s8 + $0xf8] sm:$0xff]
  %748 = vset.pattern.permute.xlu0 0
  %749 = vperm.xlu0 %748, %v715
  %v750 = vpop.permute.xlu0 %749
  %753 = vset.pattern.permute.xlu0 0
  %754 = vperm.xlu0 %753, %v716
  %v755 = vpop.permute.xlu0 %754
  %758 = vset.pattern.permute.xlu0 0
  %759 = vperm.xlu0 %758, %v717
  %v760 = vpop.permute.xlu0 %759
  %763 = vset.pattern.permute.xlu0 0
  %764 = vperm.xlu0 %763, %v718
  %v765 = vpop.permute.xlu0 %764
  %768 = vset.pattern.permute.xlu0 0
  %769 = vperm.xlu0 %768, %v719
  %v770 = vpop.permute.xlu0 %769
  %773 = vset.pattern.permute.xlu0 0
  %774 = vperm.xlu0 %773, %v720
  %v775 = vpop.permute.xlu0 %774
  %778 = vset.pattern.permute.xlu0 0
  %779 = vperm.xlu0 %778, %v721
  %v780 = vpop.permute.xlu0 %779
  %783 = vset.pattern.permute.xlu0 0
  %784 = vperm.xlu0 %783, %v722
  %v785 = vpop.permute.xlu0 %784
  %788 = vset.pattern.permute.xlu0 0
  %789 = vperm.xlu0 %788, %v723
  %v790 = vpop.permute.xlu0 %789
  %793 = vset.pattern.permute.xlu0 0
  %794 = vperm.xlu0 %793, %v724
  %v795 = vpop.permute.xlu0 %794
  %798 = vset.pattern.permute.xlu0 0
  %799 = vperm.xlu0 %798, %v725
  %v800 = vpop.permute.xlu0 %799
  %803 = vset.pattern.permute.xlu0 0
  %804 = vperm.xlu0 %803, %v726
  %v805 = vpop.permute.xlu0 %804
  %808 = vset.pattern.permute.xlu0 0
  %809 = vperm.xlu0 %808, %v727
  %v810 = vpop.permute.xlu0 %809
  %813 = vset.pattern.permute.xlu0 0
  %814 = vperm.xlu0 %813, %v728
  %v815 = vpop.permute.xlu0 %814
  %818 = vset.pattern.permute.xlu0 0
  %819 = vperm.xlu0 %818, %v729
  %v820 = vpop.permute.xlu0 %819
  %823 = vset.pattern.permute.xlu0 0
  %824 = vperm.xlu0 %823, %v730
  %v825 = vpop.permute.xlu0 %824
  %828 = vset.pattern.permute.xlu0 0
  %829 = vperm.xlu0 %828, %v731
  %v830 = vpop.permute.xlu0 %829
  %833 = vset.pattern.permute.xlu0 0
  %834 = vperm.xlu0 %833, %v732
  %v835 = vpop.permute.xlu0 %834
  %838 = vset.pattern.permute.xlu0 0
  %839 = vperm.xlu0 %838, %v733
  %v840 = vpop.permute.xlu0 %839
  %843 = vset.pattern.permute.xlu0 0
  %844 = vperm.xlu0 %843, %v734
  %v845 = vpop.permute.xlu0 %844
  %848 = vset.pattern.permute.xlu0 0
  %849 = vperm.xlu0 %848, %v735
  %v850 = vpop.permute.xlu0 %849
  %853 = vset.pattern.permute.xlu0 0
  %854 = vperm.xlu0 %853, %v736
  %v855 = vpop.permute.xlu0 %854
  %858 = vset.pattern.permute.xlu0 0
  %859 = vperm.xlu0 %858, %v737
  %v860 = vpop.permute.xlu0 %859
  %863 = vset.pattern.permute.xlu0 0
  %864 = vperm.xlu0 %863, %v738
  %v865 = vpop.permute.xlu0 %864
  %868 = vset.pattern.permute.xlu0 0
  %869 = vperm.xlu0 %868, %v739
  %v870 = vpop.permute.xlu0 %869
  %873 = vset.pattern.permute.xlu0 0
  %874 = vperm.xlu0 %873, %v740
  %v875 = vpop.permute.xlu0 %874
  %878 = vset.pattern.permute.xlu0 0
  %879 = vperm.xlu0 %878, %v741
  %v880 = vpop.permute.xlu0 %879
  %883 = vset.pattern.permute.xlu0 0
  %884 = vperm.xlu0 %883, %v742
  %v885 = vpop.permute.xlu0 %884
  %888 = vset.pattern.permute.xlu0 0
  %889 = vperm.xlu0 %888, %v743
  %v890 = vpop.permute.xlu0 %889
  %893 = vset.pattern.permute.xlu0 0
  %894 = vperm.xlu0 %893, %v744
  %v895 = vpop.permute.xlu0 %894
  %898 = vset.pattern.permute.xlu0 0
  %899 = vperm.xlu0 %898, %v745
  %v900 = vpop.permute.xlu0 %899
  %903 = vset.pattern.permute.xlu0 0
  %904 = vperm.xlu0 %903, %v746
  %v905 = vpop.permute.xlu0 %904
  %v939 = vunpack.c.l.b16 %v683
  %v940 = vunpack.c.l.b16 %v684
  %v941 = vunpack.c.l.b16 %v685
  %v942 = vunpack.c.l.b16 %v686
  %v943 = vunpack.c.l.b16 %v687
  %v944 = vunpack.c.l.b16 %v688
  %v945 = vunpack.c.l.b16 %v689
  %v946 = vunpack.c.l.b16 %v690
  %v947 = vunpack.c.l.b16 %v691
  %v948 = vunpack.c.l.b16 %v692
  %v949 = vunpack.c.l.b16 %v693
  %v950 = vunpack.c.l.b16 %v694
  %v951 = vunpack.c.l.b16 %v695
  %v952 = vunpack.c.l.b16 %v696
  %v953 = vunpack.c.l.b16 %v697
  %v954 = vunpack.c.l.b16 %v698
  %v955 = vunpack.c.l.b16 %v699
  %v956 = vunpack.c.l.b16 %v700
  %v957 = vunpack.c.l.b16 %v701
  %v958 = vunpack.c.l.b16 %v702
  %v959 = vunpack.c.l.b16 %v703
  %v960 = vunpack.c.l.b16 %v704
  %v961 = vunpack.c.l.b16 %v705
  %v962 = vunpack.c.l.b16 %v706
  %v963 = vunpack.c.l.b16 %v707
  %v964 = vunpack.c.l.b16 %v708
  %v965 = vunpack.c.l.b16 %v709
  %v966 = vunpack.c.l.b16 %v710
  %v967 = vunpack.c.l.b16 %v711
  %v968 = vunpack.c.l.b16 %v712
  %v969 = vunpack.c.l.b16 %v713
  %v970 = vunpack.c.l.b16 %v714
  %v971 = vpack.c.b16 %v940, %v939
  %v972 = vpack.c.b16 %v942, %v941
  %v973 = vpack.c.b16 %v944, %v943
  %v974 = vpack.c.b16 %v946, %v945
  %v975 = vpack.c.b16 %v948, %v947
  %v976 = vpack.c.b16 %v950, %v949
  %v977 = vpack.c.b16 %v952, %v951
  %v978 = vpack.c.b16 %v954, %v953
  %v979 = vpack.c.b16 %v956, %v955
  %v980 = vpack.c.b16 %v958, %v957
  %v981 = vpack.c.b16 %v960, %v959
  %v982 = vpack.c.b16 %v962, %v961
  %v983 = vpack.c.b16 %v964, %v963
  %v984 = vpack.c.b16 %v966, %v965
  %v985 = vpack.c.b16 %v968, %v967
  %v986 = vpack.c.b16 %v970, %v969
  %1003 = vmatprep.subr.bf16.mxu0 0
  %1004 = vmatpush1.bf16.msra.mxu0 %v675
  %1005 = vmatprep.subr.bf16.mxu0 0
  %1006 = vmatpush1.bf16.msra.mxu0 %v676
  %1007 = vmatprep.subr.bf16.mxu0 0
  %1008 = vmatpush1.bf16.msra.mxu0 %v677
  %1009 = vmatprep.subr.bf16.mxu0 0
  %1010 = vmatpush1.bf16.msra.mxu0 %v678
  %1011 = vmatprep.subr.bf16.mxu0 0
  %1012 = vmatpush1.bf16.msra.mxu0 %v679
  %1013 = vmatprep.subr.bf16.mxu0 0
  %1014 = vmatpush1.bf16.msra.mxu0 %v680
  %1015 = vmatprep.subr.bf16.mxu0 0
  %1016 = vmatpush1.bf16.msra.mxu0 %v681
  %1017 = vmatprep.subr.bf16.mxu0 0
  %1018 = vmatpush1.bf16.msra.mxu0 %v682
  %1019 = vmatprep.subr.bf16.mxu0 0
  %1020 = vmatpush1.bf16.msra.mxu0 0
  %1021 = vmatprep.subr.bf16.mxu0 0
  %1022 = vmatpush1.bf16.msra.mxu0 0
  %1023 = vmatprep.subr.bf16.mxu0 0
  %1024 = vmatpush1.bf16.msra.mxu0 0
  %1025 = vmatprep.subr.bf16.mxu0 0
  %1026 = vmatpush1.bf16.msra.mxu0 0
  %1027 = vmatprep.subr.bf16.mxu0 0
  %1028 = vmatpush1.bf16.msra.mxu0 0
  %1029 = vmatprep.subr.bf16.mxu0 0
  %1030 = vmatpush1.bf16.msra.mxu0 0
  %1031 = vmatprep.subr.bf16.mxu0 0
  %1032 = vmatpush1.bf16.msra.mxu0 0
  %1033 = vmatprep.subr.bf16.mxu0 0
  %1034 = vmatpush1.bf16.msra.mxu0 0
  %1035 = vmatprep.mubr.bf16.mxu0 0
  %1036 = vmatmul.mubr.bf16.gmra.mrb[0].mxu0 %v971
  %v1037 = vpop.f32.mrb[0].mxu0
  %v1038 = vadd.f32 %v750, %v1037
  %v1039 = vpop.f32.mrb[0].mxu0
  %v1040 = vpop.f32.mrb[0].mxu0
  %v1041 = vadd.f32 %v755, %v1040
  %v1042 = vpop.f32.mrb[0].mxu0
  %1043 = vmatprep.mubr.bf16.mxu0 0
  %1044 = vmatmul.mubr.bf16.gmra.mrb[0].mxu0 %v972
  %v1045 = vpop.f32.mrb[0].mxu0
  %v1046 = vadd.f32 %v760, %v1045
  %v1047 = vpop.f32.mrb[0].mxu0
  %v1048 = vpop.f32.mrb[0].mxu0
  %v1049 = vadd.f32 %v765, %v1048
  %v1050 = vpop.f32.mrb[0].mxu0
  %1051 = vmatprep.mubr.bf16.mxu0 0
  %1052 = vmatmul.mubr.bf16.gmra.mrb[0].mxu0 %v973
  %v1053 = vpop.f32.mrb[0].mxu0
  %v1054 = vadd.f32 %v770, %v1053
  %v1055 = vpop.f32.mrb[0].mxu0
  %v1056 = vpop.f32.mrb[0].mxu0
  %v1057 = vadd.f32 %v775, %v1056
  %v1058 = vpop.f32.mrb[0].mxu0
  %1059 = vmatprep.mubr.bf16.mxu0 0
  %1060 = vmatmul.mubr.bf16.gmra.mrb[0].mxu0 %v974
  %v1061 = vpop.f32.mrb[0].mxu0
  %v1062 = vadd.f32 %v780, %v1061
  %v1063 = vpop.f32.mrb[0].mxu0
  %v1064 = vpop.f32.mrb[0].mxu0
  %v1065 = vadd.f32 %v785, %v1064
  %v1066 = vpop.f32.mrb[0].mxu0
  %1067 = vmatprep.mubr.bf16.mxu0 0
  %1068 = vmatmul.mubr.bf16.gmra.mrb[0].mxu0 %v975
  %v1069 = vpop.f32.mrb[0].mxu0
  %v1070 = vadd.f32 %v790, %v1069
  %v1071 = vpop.f32.mrb[0].mxu0
  %v1072 = vpop.f32.mrb[0].mxu0
  %v1073 = vadd.f32 %v795, %v1072
  %v1074 = vpop.f32.mrb[0].mxu0
  %1075 = vmatprep.mubr.bf16.mxu0 0
  %1076 = vmatmul.mubr.bf16.gmra.mrb[0].mxu0 %v976
  %v1077 = vpop.f32.mrb[0].mxu0
  %v1078 = vadd.f32 %v800, %v1077
  %v1079 = vpop.f32.mrb[0].mxu0
  %v1080 = vpop.f32.mrb[0].mxu0
  %v1081 = vadd.f32 %v805, %v1080
  %v1082 = vpop.f32.mrb[0].mxu0
  %1083 = vmatprep.mubr.bf16.mxu0 0
  %1084 = vmatmul.mubr.bf16.gmra.mrb[0].mxu0 %v977
  %v1085 = vpop.f32.mrb[0].mxu0
  %v1086 = vadd.f32 %v810, %v1085
  %v1087 = vpop.f32.mrb[0].mxu0
  %v1088 = vpop.f32.mrb[0].mxu0
  %v1089 = vadd.f32 %v815, %v1088
  %v1090 = vpop.f32.mrb[0].mxu0
  %1091 = vmatprep.mubr.bf16.mxu0 0
  %1092 = vmatmul.mubr.bf16.gmra.mrb[0].mxu0 %v978
  %v1093 = vpop.f32.mrb[0].mxu0
  %v1094 = vadd.f32 %v820, %v1093
  %v1095 = vpop.f32.mrb[0].mxu0
  %v1096 = vpop.f32.mrb[0].mxu0
  %v1097 = vadd.f32 %v825, %v1096
  %v1098 = vpop.f32.mrb[0].mxu0
  %1099 = vmatprep.mubr.bf16.mxu0 0
  %1100 = vmatmul.mubr.bf16.gmra.mrb[0].mxu0 %v979
  %v1101 = vpop.f32.mrb[0].mxu0
  %v1102 = vadd.f32 %v830, %v1101
  %v1103 = vpop.f32.mrb[0].mxu0
  %v1104 = vpop.f32.mrb[0].mxu0
  %v1105 = vadd.f32 %v835, %v1104
  %v1106 = vpop.f32.mrb[0].mxu0
  %1107 = vmatprep.mubr.bf16.mxu0 0
  %1108 = vmatmul.mubr.bf16.gmra.mrb[0].mxu0 %v980
  %v1109 = vpop.f32.mrb[0].mxu0
  %v1110 = vadd.f32 %v840, %v1109
  %v1111 = vpop.f32.mrb[0].mxu0
  %v1112 = vpop.f32.mrb[0].mxu0
  %v1113 = vadd.f32 %v845, %v1112
  %v1114 = vpop.f32.mrb[0].mxu0
  %1115 = vmatprep.mubr.bf16.mxu0 0
  %1116 = vmatmul.mubr.bf16.gmra.mrb[0].mxu0 %v981
  %v1117 = vpop.f32.mrb[0].mxu0
  %v1118 = vadd.f32 %v850, %v1117
  %v1119 = vpop.f32.mrb[0].mxu0
  %v1120 = vpop.f32.mrb[0].mxu0
  %v1121 = vadd.f32 %v855, %v1120
  %v1122 = vpop.f32.mrb[0].mxu0
  %1123 = vmatprep.mubr.bf16.mxu0 0
  %1124 = vmatmul.mubr.bf16.gmra.mrb[0].mxu0 %v982
  %v1125 = vpop.f32.mrb[0].mxu0
  %v1126 = vadd.f32 %v860, %v1125
  %v1127 = vpop.f32.mrb[0].mxu0
  %v1128 = vpop.f32.mrb[0].mxu0
  %v1129 = vadd.f32 %v865, %v1128
  %v1130 = vpop.f32.mrb[0].mxu0
  %1131 = vmatprep.mubr.bf16.mxu0 0
  %1132 = vmatmul.mubr.bf16.gmra.mrb[0].mxu0 %v983
  %v1133 = vpop.f32.mrb[0].mxu0
  %v1134 = vadd.f32 %v870, %v1133
  %v1135 = vpop.f32.mrb[0].mxu0
  %v1136 = vpop.f32.mrb[0].mxu0
  %v1137 = vadd.f32 %v875, %v1136
  %v1138 = vpop.f32.mrb[0].mxu0
  %1139 = vmatprep.mubr.bf16.mxu0 0
  %1140 = vmatmul.mubr.bf16.gmra.mrb[0].mxu0 %v984
  %v1141 = vpop.f32.mrb[0].mxu0
  %v1142 = vadd.f32 %v880, %v1141
  %v1143 = vpop.f32.mrb[0].mxu0
  %v1144 = vpop.f32.mrb[0].mxu0
  %v1145 = vadd.f32 %v885, %v1144
  %v1146 = vpop.f32.mrb[0].mxu0
  %1147 = vmatprep.mubr.bf16.mxu0 0
  %1148 = vmatmul.mubr.bf16.gmra.mrb[0].mxu0 %v985
  %v1149 = vpop.f32.mrb[0].mxu0
  %v1150 = vadd.f32 %v890, %v1149
  %v1151 = vpop.f32.mrb[0].mxu0
  %v1152 = vpop.f32.mrb[0].mxu0
  %v1153 = vadd.f32 %v895, %v1152
  %v1154 = vpop.f32.mrb[0].mxu0
  %1155 = vmatprep.mubr.bf16.mxu0 0
  %1156 = vmatmul.mubr.bf16.gmra.mrb[0].mxu0 %v986
  %v1157 = vpop.f32.mrb[0].mxu0
  %v1158 = vadd.f32 %v900, %v1157
  %v1159 = vpop.f32.mrb[0].mxu0
  %v1160 = vpop.f32.mrb[0].mxu0
  %v1161 = vadd.f32 %v905, %v1160
  %v1162 = vpop.f32.mrb[0].mxu0
  %1163 = vdwg.mxu0
  %v1164 = vpack.c.bf16 %v1041, %v1038
  %v1165 = vpack.c.bf16 %v1049, %v1046
  %v1166 = vpack.c.bf16 %v1057, %v1054
  %v1167 = vpack.c.bf16 %v1065, %v1062
  %v1168 = vpack.c.bf16 %v1073, %v1070
  %v1169 = vpack.c.bf16 %v1081, %v1078
  %v1170 = vpack.c.bf16 %v1089, %v1086
  %v1171 = vpack.c.bf16 %v1097, %v1094
  %v1172 = vpack.c.bf16 %v1105, %v1102
  %v1173 = vpack.c.bf16 %v1113, %v1110
  %v1174 = vpack.c.bf16 %v1121, %v1118
  %v1175 = vpack.c.bf16 %v1129, %v1126
  %v1176 = vpack.c.bf16 %v1137, %v1134
  %v1177 = vpack.c.bf16 %v1145, %v1142
  %v1178 = vpack.c.bf16 %v1153, %v1150
  %v1179 = vpack.c.bf16 %v1161, %v1158
  %vm1180 = vcmp.gt.bf16.partialorder %v1164, 0
  %vm1181 = vcmp.gt.bf16.partialorder %v1165, 0
  %vm1182 = vcmp.gt.bf16.partialorder %v1166, 0
  %vm1183 = vcmp.gt.bf16.partialorder %v1167, 0
  %vm1184 = vcmp.gt.bf16.partialorder %v1168, 0
  %vm1185 = vcmp.gt.bf16.partialorder %v1169, 0
  %vm1186 = vcmp.gt.bf16.partialorder %v1170, 0
  %vm1187 = vcmp.gt.bf16.partialorder %v1171, 0
  %vm1188 = vcmp.gt.bf16.partialorder %v1172, 0
  %vm1189 = vcmp.gt.bf16.partialorder %v1173, 0
  %vm1190 = vcmp.gt.bf16.partialorder %v1174, 0
  %vm1191 = vcmp.gt.bf16.partialorder %v1175, 0
  %vm1192 = vcmp.gt.bf16.partialorder %v1176, 0
  %vm1193 = vcmp.gt.bf16.partialorder %v1177, 0
  %vm1194 = vcmp.gt.bf16.partialorder %v1178, 0
  %vm1195 = vcmp.gt.bf16.partialorder %v1179, 0
  %v1196 = vmul.bf16 %v1164, 1009007652
  %v1197 = vmul.bf16 %v1165, 1009007652
  %v1198 = vmul.bf16 %v1166, 1009007652
  %v1199 = vmul.bf16 %v1167, 1009007652
  %v1200 = vmul.bf16 %v1168, 1009007652
  %v1201 = vmul.bf16 %v1169, 1009007652
  %v1202 = vmul.bf16 %v1170, 1009007652
  %v1203 = vmul.bf16 %v1171, 1009007652
  %v1204 = vmul.bf16 %v1172, 1009007652
  %v1205 = vmul.bf16 %v1173, 1009007652
  %v1206 = vmul.bf16 %v1174, 1009007652
  %v1207 = vmul.bf16 %v1175, 1009007652
  %v1208 = vmul.bf16 %v1176, 1009007652
  %v1209 = vmul.bf16 %v1177, 1009007652
  %v1210 = vmul.bf16 %v1178, 1009007652
  %v1211 = vmul.bf16 %v1179, 1009007652
  %v1212 = vsel %vm1180, %v1164, %v1196
  %v1213 = vsel %vm1181, %v1165, %v1197
  %v1214 = vsel %vm1182, %v1166, %v1198
  %v1215 = vsel %vm1183, %v1167, %v1199
  %v1216 = vsel %vm1184, %v1168, %v1200
  %v1217 = vsel %vm1185, %v1169, %v1201
  %v1218 = vsel %vm1186, %v1170, %v1202
  %v1219 = vsel %vm1187, %v1171, %v1203
  %v1220 = vsel %vm1188, %v1172, %v1204
  %v1221 = vsel %vm1189, %v1173, %v1205
  %v1222 = vsel %vm1190, %v1174, %v1206
  %v1223 = vsel %vm1191, %v1175, %v1207
  %v1224 = vsel %vm1192, %v1176, %v1208
  %v1225 = vsel %vm1193, %v1177, %v1209
  %v1226 = vsel %vm1194, %v1178, %v1210
  %v1227 = vsel %vm1195, %v1179, %v1211
  %v1228 = vld [vmem:[%s9] sm:$0xff]
  %v1229 = vld [vmem:[%s9 + $0x8] sm:$0xff]
  %v1230 = vld [vmem:[%s9 + $0x10] sm:$0xff]
  %v1231 = vld [vmem:[%s9 + $0x18] sm:$0xff]
  %v1232 = vld [vmem:[%s9 + $0x20] sm:$0xff]
  %v1233 = vld [vmem:[%s9 + $0x28] sm:$0xff]
  %v1234 = vld [vmem:[%s9 + $0x30] sm:$0xff]
  %v1235 = vld [vmem:[%s9 + $0x38] sm:$0xff]
  %v1236 = vld [vmem:[%s9 + $0x40] sm:$0xff]
  %v1237 = vld [vmem:[%s9 + $0x48] sm:$0xff]
  %v1238 = vld [vmem:[%s9 + $0x50] sm:$0xff]
  %v1239 = vld [vmem:[%s9 + $0x58] sm:$0xff]
  %v1240 = vld [vmem:[%s9 + $0x60] sm:$0xff]
  %v1241 = vld [vmem:[%s9 + $0x68] sm:$0xff]
  %v1242 = vld [vmem:[%s9 + $0x70] sm:$0xff]
  %v1243 = vld [vmem:[%s9 + $0x78] sm:$0xff]
  %v1244 = vld [vmem:[%s9 + $0x80] sm:$0xff]
  %v1245 = vld [vmem:[%s9 + $0x88] sm:$0xff]
  %v1246 = vld [vmem:[%s9 + $0x90] sm:$0xff]
  %v1247 = vld [vmem:[%s9 + $0x98] sm:$0xff]
  %v1248 = vld [vmem:[%s9 + $0xa0] sm:$0xff]
  %v1249 = vld [vmem:[%s9 + $0xa8] sm:$0xff]
  %v1250 = vld [vmem:[%s9 + $0xb0] sm:$0xff]
  %v1251 = vld [vmem:[%s9 + $0xb8] sm:$0xff]
  %v1252 = vld [vmem:[%s9 + $0xc0] sm:$0xff]
  %v1253 = vld [vmem:[%s9 + $0xc8] sm:$0xff]
  %v1254 = vld [vmem:[%s9 + $0xd0] sm:$0xff]
  %v1255 = vld [vmem:[%s9 + $0xd8] sm:$0xff]
  %v1256 = vld [vmem:[%s9 + $0xe0] sm:$0xff]
  %v1257 = vld [vmem:[%s9 + $0xe8] sm:$0xff]
  %v1258 = vld [vmem:[%s9 + $0xf0] sm:$0xff]
  %v1259 = vld [vmem:[%s9 + $0xf8] sm:$0xff]
  %v1260 = vld [vmem:[%s10] sm:$0xff]
  %v1261 = vld [vmem:[%s10 + $0x8] sm:$0xff]
  %v1262 = vld [vmem:[%s10 + $0x10] sm:$0xff]
  %v1263 = vld [vmem:[%s10 + $0x18] sm:$0xff]
  %v1264 = vld [vmem:[%s10 + $0x20] sm:$0xff]
  %v1265 = vld [vmem:[%s10 + $0x28] sm:$0xff]
  %v1266 = vld [vmem:[%s10 + $0x30] sm:$0xff]
  %v1267 = vld [vmem:[%s10 + $0x38] sm:$0xff]
  %v1268 = vld [vmem:[%s10 + $0x40] sm:$0xff]
  %v1269 = vld [vmem:[%s10 + $0x48] sm:$0xff]
  %v1270 = vld [vmem:[%s10 + $0x50] sm:$0xff]
  %v1271 = vld [vmem:[%s10 + $0x58] sm:$0xff]
  %v1272 = vld [vmem:[%s10 + $0x60] sm:$0xff]
  %v1273 = vld [vmem:[%s10 + $0x68] sm:$0xff]
  %v1274 = vld [vmem:[%s10 + $0x70] sm:$0xff]
  %v1275 = vld [vmem:[%s10 + $0x78] sm:$0xff]
  %v1276 = vld [vmem:[%s10 + $0x80] sm:$0xff]
  %v1277 = vld [vmem:[%s10 + $0x88] sm:$0xff]
  %v1278 = vld [vmem:[%s10 + $0x90] sm:$0xff]
  %v1279 = vld [vmem:[%s10 + $0x98] sm:$0xff]
  %v1280 = vld [vmem:[%s10 + $0xa0] sm:$0xff]
  %v1281 = vld [vmem:[%s10 + $0xa8] sm:$0xff]
  %v1282 = vld [vmem:[%s10 + $0xb0] sm:$0xff]
  %v1283 = vld [vmem:[%s10 + $0xb8] sm:$0xff]
  %v1284 = vld [vmem:[%s10 + $0xc0] sm:$0xff]
  %v1285 = vld [vmem:[%s10 + $0xc8] sm:$0xff]
  %v1286 = vld [vmem:[%s10 + $0xd0] sm:$0xff]
  %v1287 = vld [vmem:[%s10 + $0xd8] sm:$0xff]
  %v1288 = vld [vmem:[%s10 + $0xe0] sm:$0xff]
  %v1289 = vld [vmem:[%s10 + $0xe8] sm:$0xff]
  %v1290 = vld [vmem:[%s10 + $0xf0] sm:$0xff]
  %v1291 = vld [vmem:[%s10 + $0xf8] sm:$0xff]
  %1293 = vset.pattern.permute.xlu0 0
  %1294 = vperm.xlu0 %1293, %v1260
  %v1295 = vpop.permute.xlu0 %1294
  %1298 = vset.pattern.permute.xlu0 0
  %1299 = vperm.xlu0 %1298, %v1261
  %v1300 = vpop.permute.xlu0 %1299
  %1303 = vset.pattern.permute.xlu0 0
  %1304 = vperm.xlu0 %1303, %v1262
  %v1305 = vpop.permute.xlu0 %1304
  %1308 = vset.pattern.permute.xlu0 0
  %1309 = vperm.xlu0 %1308, %v1263
  %v1310 = vpop.permute.xlu0 %1309
  %1313 = vset.pattern.permute.xlu0 0
  %1314 = vperm.xlu0 %1313, %v1264
  %v1315 = vpop.permute.xlu0 %1314
  %1318 = vset.pattern.permute.xlu0 0
  %1319 = vperm.xlu0 %1318, %v1265
  %v1320 = vpop.permute.xlu0 %1319
  %1323 = vset.pattern.permute.xlu0 0
  %1324 = vperm.xlu0 %1323, %v1266
  %v1325 = vpop.permute.xlu0 %1324
  %1328 = vset.pattern.permute.xlu0 0
  %1329 = vperm.xlu0 %1328, %v1267
  %v1330 = vpop.permute.xlu0 %1329
  %1333 = vset.pattern.permute.xlu0 0
  %1334 = vperm.xlu0 %1333, %v1268
  %v1335 = vpop.permute.xlu0 %1334
  %1338 = vset.pattern.permute.xlu0 0
  %1339 = vperm.xlu0 %1338, %v1269
  %v1340 = vpop.permute.xlu0 %1339
  %1343 = vset.pattern.permute.xlu0 0
  %1344 = vperm.xlu0 %1343, %v1270
  %v1345 = vpop.permute.xlu0 %1344
  %1348 = vset.pattern.permute.xlu0 0
  %1349 = vperm.xlu0 %1348, %v1271
  %v1350 = vpop.permute.xlu0 %1349
  %1353 = vset.pattern.permute.xlu0 0
  %1354 = vperm.xlu0 %1353, %v1272
  %v1355 = vpop.permute.xlu0 %1354
  %1358 = vset.pattern.permute.xlu0 0
  %1359 = vperm.xlu0 %1358, %v1273
  %v1360 = vpop.permute.xlu0 %1359
  %1363 = vset.pattern.permute.xlu0 0
  %1364 = vperm.xlu0 %1363, %v1274
  %v1365 = vpop.permute.xlu0 %1364
  %1368 = vset.pattern.permute.xlu0 0
  %1369 = vperm.xlu0 %1368, %v1275
  %v1370 = vpop.permute.xlu0 %1369
  %1373 = vset.pattern.permute.xlu0 0
  %1374 = vperm.xlu0 %1373, %v1276
  %v1375 = vpop.permute.xlu0 %1374
  %1378 = vset.pattern.permute.xlu0 0
  %1379 = vperm.xlu0 %1378, %v1277
  %v1380 = vpop.permute.xlu0 %1379
  %1383 = vset.pattern.permute.xlu0 0
  %1384 = vperm.xlu0 %1383, %v1278
  %v1385 = vpop.permute.xlu0 %1384
  %1388 = vset.pattern.permute.xlu0 0
  %1389 = vperm.xlu0 %1388, %v1279
  %v1390 = vpop.permute.xlu0 %1389
  %1393 = vset.pattern.permute.xlu0 0
  %1394 = vperm.xlu0 %1393, %v1280
  %v1395 = vpop.permute.xlu0 %1394
  %1398 = vset.pattern.permute.xlu0 0
  %1399 = vperm.xlu0 %1398, %v1281
  %v1400 = vpop.permute.xlu0 %1399
  %1403 = vset.pattern.permute.xlu0 0
  %1404 = vperm.xlu0 %1403, %v1282
  %v1405 = vpop.permute.xlu0 %1404
  %1408 = vset.pattern.permute.xlu0 0
  %1409 = vperm.xlu0 %1408, %v1283
  %v1410 = vpop.permute.xlu0 %1409
  %1413 = vset.pattern.permute.xlu0 0
  %1414 = vperm.xlu0 %1413, %v1284
  %v1415 = vpop.permute.xlu0 %1414
  %1418 = vset.pattern.permute.xlu0 0
  %1419 = vperm.xlu0 %1418, %v1285
  %v1420 = vpop.permute.xlu0 %1419
  %1423 = vset.pattern.permute.xlu0 0
  %1424 = vperm.xlu0 %1423, %v1286
  %v1425 = vpop.permute.xlu0 %1424
  %1428 = vset.pattern.permute.xlu0 0
  %1429 = vperm.xlu0 %1428, %v1287
  %v1430 = vpop.permute.xlu0 %1429
  %1433 = vset.pattern.permute.xlu0 0
  %1434 = vperm.xlu0 %1433, %v1288
  %v1435 = vpop.permute.xlu0 %1434
  %1438 = vset.pattern.permute.xlu0 0
  %1439 = vperm.xlu0 %1438, %v1289
  %v1440 = vpop.permute.xlu0 %1439
  %1443 = vset.pattern.permute.xlu0 0
  %1444 = vperm.xlu0 %1443, %v1290
  %v1445 = vpop.permute.xlu0 %1444
  %1448 = vset.pattern.permute.xlu0 0
  %1449 = vperm.xlu0 %1448, %v1291
  %v1450 = vpop.permute.xlu0 %1449
  %v1484 = vunpack.c.l.b16 %v1228
  %v1485 = vunpack.c.h.b16 %v1228
  %v1486 = vunpack.c.l.b16 %v1229
  %v1487 = vunpack.c.h.b16 %v1229
  %v1488 = vunpack.c.l.b16 %v1230
  %v1489 = vunpack.c.h.b16 %v1230
  %v1490 = vunpack.c.l.b16 %v1231
  %v1491 = vunpack.c.h.b16 %v1231
  %v1492 = vunpack.c.l.b16 %v1232
  %v1493 = vunpack.c.h.b16 %v1232
  %v1494 = vunpack.c.l.b16 %v1233
  %v1495 = vunpack.c.h.b16 %v1233
  %v1496 = vunpack.c.l.b16 %v1234
  %v1497 = vunpack.c.h.b16 %v1234
  %v1498 = vunpack.c.l.b16 %v1235
  %v1499 = vunpack.c.h.b16 %v1235
  %v1500 = vunpack.c.l.b16 %v1236
  %v1501 = vunpack.c.h.b16 %v1236
  %v1502 = vunpack.c.l.b16 %v1237
  %v1503 = vunpack.c.h.b16 %v1237
  %v1504 = vunpack.c.l.b16 %v1238
  %v1505 = vunpack.c.h.b16 %v1238
  %v1506 = vunpack.c.l.b16 %v1239
  %v1507 = vunpack.c.h.b16 %v1239
  %v1508 = vunpack.c.l.b16 %v1240
  %v1509 = vunpack.c.h.b16 %v1240
  %v1510 = vunpack.c.l.b16 %v1241
  %v1511 = vunpack.c.h.b16 %v1241
  %v1512 = vunpack.c.l.b16 %v1242
  %v1513 = vunpack.c.h.b16 %v1242
  %v1514 = vunpack.c.l.b16 %v1243
  %v1515 = vunpack.c.h.b16 %v1243
  %v1516 = vunpack.c.l.b16 %v1244
  %v1517 = vunpack.c.h.b16 %v1244
  %v1518 = vunpack.c.l.b16 %v1245
  %v1519 = vunpack.c.h.b16 %v1245
  %v1520 = vunpack.c.l.b16 %v1246
  %v1521 = vunpack.c.h.b16 %v1246
  %v1522 = vunpack.c.l.b16 %v1247
  %v1523 = vunpack.c.h.b16 %v1247
  %v1524 = vunpack.c.l.b16 %v1248
  %v1525 = vunpack.c.h.b16 %v1248
  %v1526 = vunpack.c.l.b16 %v1249
  %v1527 = vunpack.c.h.b16 %v1249
  %v1528 = vunpack.c.l.b16 %v1250
  %v1529 = vunpack.c.h.b16 %v1250
  %v1530 = vunpack.c.l.b16 %v1251
  %v1531 = vunpack.c.h.b16 %v1251
  %v1532 = vunpack.c.l.b16 %v1252
  %v1533 = vunpack.c.h.b16 %v1252
  %v1534 = vunpack.c.l.b16 %v1253
  %v1535 = vunpack.c.h.b16 %v1253
  %v1536 = vunpack.c.l.b16 %v1254
  %v1537 = vunpack.c.h.b16 %v1254
  %v1538 = vunpack.c.l.b16 %v1255
  %v1539 = vunpack.c.h.b16 %v1255
  %v1540 = vunpack.c.l.b16 %v1256
  %v1541 = vunpack.c.h.b16 %v1256
  %v1542 = vunpack.c.l.b16 %v1257
  %v1543 = vunpack.c.h.b16 %v1257
  %v1544 = vunpack.c.l.b16 %v1258
  %v1545 = vunpack.c.h.b16 %v1258
  %v1546 = vunpack.c.l.b16 %v1259
  %v1547 = vunpack.c.h.b16 %v1259
  %v1548 = vpack.c.b16 %v1486, %v1484
  %v1549 = vpack.c.b16 %v1487, %v1485
  %v1550 = vpack.c.b16 %v1490, %v1488
  %v1551 = vpack.c.b16 %v1491, %v1489
  %v1552 = vpack.c.b16 %v1494, %v1492
  %v1553 = vpack.c.b16 %v1495, %v1493
  %v1554 = vpack.c.b16 %v1498, %v1496
  %v1555 = vpack.c.b16 %v1499, %v1497
  %v1556 = vpack.c.b16 %v1502, %v1500
  %v1557 = vpack.c.b16 %v1503, %v1501
  %v1558 = vpack.c.b16 %v1506, %v1504
  %v1559 = vpack.c.b16 %v1507, %v1505
  %v1560 = vpack.c.b16 %v1510, %v1508
  %v1561 = vpack.c.b16 %v1511, %v1509
  %v1562 = vpack.c.b16 %v1514, %v1512
  %v1563 = vpack.c.b16 %v1515, %v1513
  %v1564 = vpack.c.b16 %v1518, %v1516
  %v1565 = vpack.c.b16 %v1519, %v1517
  %v1566 = vpack.c.b16 %v1522, %v1520
  %v1567 = vpack.c.b16 %v1523, %v1521
  %v1568 = vpack.c.b16 %v1526, %v1524
  %v1569 = vpack.c.b16 %v1527, %v1525
  %v1570 = vpack.c.b16 %v1530, %v1528
  %v1571 = vpack.c.b16 %v1531, %v1529
  %v1572 = vpack.c.b16 %v1534, %v1532
  %v1573 = vpack.c.b16 %v1535, %v1533
  %v1574 = vpack.c.b16 %v1538, %v1536
  %v1575 = vpack.c.b16 %v1539, %v1537
  %v1576 = vpack.c.b16 %v1542, %v1540
  %v1577 = vpack.c.b16 %v1543, %v1541
  %v1578 = vpack.c.b16 %v1546, %v1544
  %v1579 = vpack.c.b16 %v1547, %v1545
  %1612 = vmatprep.subr.bf16.mxu0 0
  %1613 = vmatpush1.bf16.msra.mxu0 %v1212
  %1614 = vmatprep.subr.bf16.mxu0 0
  %1615 = vmatpush1.bf16.msra.mxu0 %v1213
  %1616 = vmatprep.subr.bf16.mxu0 0
  %1617 = vmatpush1.bf16.msra.mxu0 %v1214
  %1618 = vmatprep.subr.bf16.mxu0 0
  %1619 = vmatpush1.bf16.msra.mxu0 %v1215
  %1620 = vmatprep.subr.bf16.mxu0 0
  %1621 = vmatpush1.bf16.msra.mxu0 %v1216
  %1622 = vmatprep.subr.bf16.mxu0 0
  %1623 = vmatpush1.bf16.msra.mxu0 %v1217
  %1624 = vmatprep.subr.bf16.mxu0 0
  %1625 = vmatpush1.bf16.msra.mxu0 %v1218
  %1626 = vmatprep.subr.bf16.mxu0 0
  %1627 = vmatpush1.bf16.msra.mxu0 %v1219
  %1628 = vmatprep.subr.bf16.mxu0 0
  %1629 = vmatpush1.bf16.msra.mxu0 %v1220
  %1630 = vmatprep.subr.bf16.mxu0 0
  %1631 = vmatpush1.bf16.msra.mxu0 %v1221
  %1632 = vmatprep.subr.bf16.mxu0 0
  %1633 = vmatpush1.bf16.msra.mxu0 %v1222
  %1634 = vmatprep.subr.bf16.mxu0 0
  %1635 = vmatpush1.bf16.msra.mxu0 %v1223
  %1636 = vmatprep.subr.bf16.mxu0 0
  %1637 = vmatpush1.bf16.msra.mxu0 %v1224
  %1638 = vmatprep.subr.bf16.mxu0 0
  %1639 = vmatpush1.bf16.msra.mxu0 %v1225
  %1640 = vmatprep.subr.bf16.mxu0 0
  %1641 = vmatpush1.bf16.msra.mxu0 %v1226
  %1642 = vmatprep.subr.bf16.mxu0 0
  %1643 = vmatpush1.bf16.msra.mxu0 %v1227
  %1644 = vmatprep.mubr.bf16.mxu0 %v1549
  %1645 = vmatmul.mubr.bf16.gmra.mrb[0].mxu0 %v1548
  %v1646 = vpop.f32.mrb[0].mxu0
  %v1647 = vadd.f32 %v1295, %v1646
  %v1648 = vpop.f32.mrb[0].mxu0
  %v1649 = vpop.f32.mrb[0].mxu0
  %v1650 = vadd.f32 %v1300, %v1649
  %v1651 = vpop.f32.mrb[0].mxu0
  %1652 = vmatprep.mubr.bf16.mxu0 %v1551
  %1653 = vmatmul.mubr.bf16.gmra.mrb[0].mxu0 %v1550
  %v1654 = vpop.f32.mrb[0].mxu0
  %v1655 = vadd.f32 %v1305, %v1654
  %v1656 = vpop.f32.mrb[0].mxu0
  %v1657 = vpop.f32.mrb[0].mxu0
  %v1658 = vadd.f32 %v1310, %v1657
  %v1659 = vpop.f32.mrb[0].mxu0
  %1660 = vmatprep.mubr.bf16.mxu0 %v1553
  %1661 = vmatmul.mubr.bf16.gmra.mrb[0].mxu0 %v1552
  %v1662 = vpop.f32.mrb[0].mxu0
  %v1663 = vadd.f32 %v1315, %v1662
  %v1664 = vpop.f32.mrb[0].mxu0
  %v1665 = vpop.f32.mrb[0].mxu0
  %v1666 = vadd.f32 %v1320, %v1665
  %v1667 = vpop.f32.mrb[0].mxu0
  %1668 = vmatprep.mubr.bf16.mxu0 %v1555
  %1669 = vmatmul.mubr.bf16.gmra.mrb[0].mxu0 %v1554
  %v1670 = vpop.f32.mrb[0].mxu0
  %v1671 = vadd.f32 %v1325, %v1670
  %v1672 = vpop.f32.mrb[0].mxu0
  %v1673 = vpop.f32.mrb[0].mxu0
  %v1674 = vadd.f32 %v1330, %v1673
  %v1675 = vpop.f32.mrb[0].mxu0
  %1676 = vmatprep.mubr.bf16.mxu0 %v1557
  %1677 = vmatmul.mubr.bf16.gmra.mrb[0].mxu0 %v1556
  %v1678 = vpop.f32.mrb[0].mxu0
  %v1679 = vadd.f32 %v1335, %v1678
  %v1680 = vpop.f32.mrb[0].mxu0
  %v1681 = vpop.f32.mrb[0].mxu0
  %v1682 = vadd.f32 %v1340, %v1681
  %v1683 = vpop.f32.mrb[0].mxu0
  %1684 = vmatprep.mubr.bf16.mxu0 %v1559
  %1685 = vmatmul.mubr.bf16.gmra.mrb[0].mxu0 %v1558
  %v1686 = vpop.f32.mrb[0].mxu0
  %v1687 = vadd.f32 %v1345, %v1686
  %v1688 = vpop.f32.mrb[0].mxu0
  %v1689 = vpop.f32.mrb[0].mxu0
  %v1690 = vadd.f32 %v1350, %v1689
  %v1691 = vpop.f32.mrb[0].mxu0
  %1692 = vmatprep.mubr.bf16.mxu0 %v1561
  %1693 = vmatmul.mubr.bf16.gmra.mrb[0].mxu0 %v1560
  %v1694 = vpop.f32.mrb[0].mxu0
  %v1695 = vadd.f32 %v1355, %v1694
  %v1696 = vpop.f32.mrb[0].mxu0
  %v1697 = vpop.f32.mrb[0].mxu0
  %v1698 = vadd.f32 %v1360, %v1697
  %v1699 = vpop.f32.mrb[0].mxu0
  %1700 = vmatprep.mubr.bf16.mxu0 %v1563
  %1701 = vmatmul.mubr.bf16.gmra.mrb[0].mxu0 %v1562
  %v1702 = vpop.f32.mrb[0].mxu0
  %v1703 = vadd.f32 %v1365, %v1702
  %v1704 = vpop.f32.mrb[0].mxu0
  %v1705 = vpop.f32.mrb[0].mxu0
  %v1706 = vadd.f32 %v1370, %v1705
  %v1707 = vpop.f32.mrb[0].mxu0
  %1708 = vmatprep.mubr.bf16.mxu0 %v1565
  %1709 = vmatmul.mubr.bf16.gmra.mrb[0].mxu0 %v1564
  %v1710 = vpop.f32.mrb[0].mxu0
  %v1711 = vadd.f32 %v1375, %v1710
  %v1712 = vpop.f32.mrb[0].mxu0
  %v1713 = vpop.f32.mrb[0].mxu0
  %v1714 = vadd.f32 %v1380, %v1713
  %v1715 = vpop.f32.mrb[0].mxu0
  %1716 = vmatprep.mubr.bf16.mxu0 %v1567
  %1717 = vmatmul.mubr.bf16.gmra.mrb[0].mxu0 %v1566
  %v1718 = vpop.f32.mrb[0].mxu0
  %v1719 = vadd.f32 %v1385, %v1718
  %v1720 = vpop.f32.mrb[0].mxu0
  %v1721 = vpop.f32.mrb[0].mxu0
  %v1722 = vadd.f32 %v1390, %v1721
  %v1723 = vpop.f32.mrb[0].mxu0
  %1724 = vmatprep.mubr.bf16.mxu0 %v1569
  %1725 = vmatmul.mubr.bf16.gmra.mrb[0].mxu0 %v1568
  %v1726 = vpop.f32.mrb[0].mxu0
  %v1727 = vadd.f32 %v1395, %v1726
  %v1728 = vpop.f32.mrb[0].mxu0
  %v1729 = vpop.f32.mrb[0].mxu0
  %v1730 = vadd.f32 %v1400, %v1729
  %v1731 = vpop.f32.mrb[0].mxu0
  %1732 = vmatprep.mubr.bf16.mxu0 %v1571
  %1733 = vmatmul.mubr.bf16.gmra.mrb[0].mxu0 %v1570
  %v1734 = vpop.f32.mrb[0].mxu0
  %v1735 = vadd.f32 %v1405, %v1734
  %v1736 = vpop.f32.mrb[0].mxu0
  %v1737 = vpop.f32.mrb[0].mxu0
  %v1738 = vadd.f32 %v1410, %v1737
  %v1739 = vpop.f32.mrb[0].mxu0
  %1740 = vmatprep.mubr.bf16.mxu0 %v1573
  %1741 = vmatmul.mubr.bf16.gmra.mrb[0].mxu0 %v1572
  %v1742 = vpop.f32.mrb[0].mxu0
  %v1743 = vadd.f32 %v1415, %v1742
  %v1744 = vpop.f32.mrb[0].mxu0
  %v1745 = vpop.f32.mrb[0].mxu0
  %v1746 = vadd.f32 %v1420, %v1745
  %v1747 = vpop.f32.mrb[0].mxu0
  %1748 = vmatprep.mubr.bf16.mxu0 %v1575
  %1749 = vmatmul.mubr.bf16.gmra.mrb[0].mxu0 %v1574
  %v1750 = vpop.f32.mrb[0].mxu0
  %v1751 = vadd.f32 %v1425, %v1750
  %v1752 = vpop.f32.mrb[0].mxu0
  %v1753 = vpop.f32.mrb[0].mxu0
  %v1754 = vadd.f32 %v1430, %v1753
  %v1755 = vpop.f32.mrb[0].mxu0
  %1756 = vmatprep.mubr.bf16.mxu0 %v1577
  %1757 = vmatmul.mubr.bf16.gmra.mrb[0].mxu0 %v1576
  %v1758 = vpop.f32.mrb[0].mxu0
  %v1759 = vadd.f32 %v1435, %v1758
  %v1760 = vpop.f32.mrb[0].mxu0
  %v1761 = vpop.f32.mrb[0].mxu0
  %v1762 = vadd.f32 %v1440, %v1761
  %v1763 = vpop.f32.mrb[0].mxu0
  %1764 = vmatprep.mubr.bf16.mxu0 %v1579
  %1765 = vmatmul.mubr.bf16.gmra.mrb[0].mxu0 %v1578
  %v1766 = vpop.f32.mrb[0].mxu0
  %v1767 = vadd.f32 %v1445, %v1766
  %v1768 = vpop.f32.mrb[0].mxu0
  %v1769 = vpop.f32.mrb[0].mxu0
  %v1770 = vadd.f32 %v1450, %v1769
  %v1771 = vpop.f32.mrb[0].mxu0
  %1772 = vdwg.mxu0
  %v1773 = vpack.c.bf16 %v1650, %v1647
  %v1774 = vpack.c.bf16 %v1658, %v1655
  %v1775 = vpack.c.bf16 %v1666, %v1663
  %v1776 = vpack.c.bf16 %v1674, %v1671
  %v1777 = vpack.c.bf16 %v1682, %v1679
  %v1778 = vpack.c.bf16 %v1690, %v1687
  %v1779 = vpack.c.bf16 %v1698, %v1695
  %v1780 = vpack.c.bf16 %v1706, %v1703
  %v1781 = vpack.c.bf16 %v1714, %v1711
  %v1782 = vpack.c.bf16 %v1722, %v1719
  %v1783 = vpack.c.bf16 %v1730, %v1727
  %v1784 = vpack.c.bf16 %v1738, %v1735
  %v1785 = vpack.c.bf16 %v1746, %v1743
  %v1786 = vpack.c.bf16 %v1754, %v1751
  %v1787 = vpack.c.bf16 %v1762, %v1759
  %v1788 = vpack.c.bf16 %v1770, %v1767
  %v1789 = vmax.bf16 %v1773, 0
  %v1790 = vmax.bf16 %v1774, 0
  %v1791 = vmax.bf16 %v1775, 0
  %v1792 = vmax.bf16 %v1776, 0
  %v1793 = vmax.bf16 %v1777, 0
  %v1794 = vmax.bf16 %v1778, 0
  %v1795 = vmax.bf16 %v1779, 0
  %v1796 = vmax.bf16 %v1780, 0
  %v1797 = vmax.bf16 %v1781, 0
  %v1798 = vmax.bf16 %v1782, 0
  %v1799 = vmax.bf16 %v1783, 0
  %v1800 = vmax.bf16 %v1784, 0
  %v1801 = vmax.bf16 %v1785, 0
  %v1802 = vmax.bf16 %v1786, 0
  %v1803 = vmax.bf16 %v1787, 0
  %v1804 = vmax.bf16 %v1788, 0
  %v1805 = vunpack.c.l.bf16 %v1789
  %v1806 = vunpack.c.h.bf16 %v1789
  %v1807 = vunpack.c.l.bf16 %v1790
  %v1808 = vunpack.c.h.bf16 %v1790
  %v1809 = vunpack.c.l.bf16 %v1791
  %v1810 = vunpack.c.h.bf16 %v1791
  %v1811 = vunpack.c.l.bf16 %v1792
  %v1812 = vunpack.c.h.bf16 %v1792
  %v1813 = vunpack.c.l.bf16 %v1793
  %v1814 = vunpack.c.h.bf16 %v1793
  %v1815 = vunpack.c.l.bf16 %v1794
  %v1816 = vunpack.c.h.bf16 %v1794
  %v1817 = vunpack.c.l.bf16 %v1795
  %v1818 = vunpack.c.h.bf16 %v1795
  %v1819 = vunpack.c.l.bf16 %v1796
  %v1820 = vunpack.c.h.bf16 %v1796
  %v1821 = vunpack.c.l.bf16 %v1797
  %v1822 = vunpack.c.h.bf16 %v1797
  %v1823 = vunpack.c.l.bf16 %v1798
  %v1824 = vunpack.c.h.bf16 %v1798
  %v1825 = vunpack.c.l.bf16 %v1799
  %v1826 = vunpack.c.h.bf16 %v1799
  %v1827 = vunpack.c.l.bf16 %v1800
  %v1828 = vunpack.c.h.bf16 %v1800
  %v1829 = vunpack.c.l.bf16 %v1801
  %v1830 = vunpack.c.h.bf16 %v1801
  %v1831 = vunpack.c.l.bf16 %v1802
  %v1832 = vunpack.c.h.bf16 %v1802
  %v1833 = vunpack.c.l.bf16 %v1803
  %v1834 = vunpack.c.h.bf16 %v1803
  %v1835 = vunpack.c.l.bf16 %v1804
  %v1836 = vunpack.c.h.bf16 %v1804
  %v1837 = vld [vmem:[%s11] sm:$0xff]
  %v1838 = vld [vmem:[%s11 + $0x8] sm:$0xff]
  %v1839 = vld [vmem:[%s11 + $0x10] sm:$0xff]
  %v1840 = vld [vmem:[%s11 + $0x18] sm:$0xff]
  %v1841 = vld [vmem:[%s11 + $0x20] sm:$0xff]
  %v1842 = vld [vmem:[%s11 + $0x28] sm:$0xff]
  %v1843 = vld [vmem:[%s11 + $0x30] sm:$0xff]
  %v1844 = vld [vmem:[%s11 + $0x38] sm:$0xff]
  %v1845 = vld [vmem:[%s11 + $0x40] sm:$0xff]
  %v1846 = vld [vmem:[%s11 + $0x48] sm:$0xff]
  %v1847 = vld [vmem:[%s11 + $0x50] sm:$0xff]
  %v1848 = vld [vmem:[%s11 + $0x58] sm:$0xff]
  %v1849 = vld [vmem:[%s11 + $0x60] sm:$0xff]
  %v1850 = vld [vmem:[%s11 + $0x68] sm:$0xff]
  %v1851 = vld [vmem:[%s11 + $0x70] sm:$0xff]
  %v1852 = vld [vmem:[%s11 + $0x78] sm:$0xff]
  %v1853 = vld [vmem:[%s11 + $0x80] sm:$0xff]
  %v1854 = vld [vmem:[%s11 + $0x88] sm:$0xff]
  %v1855 = vld [vmem:[%s11 + $0x90] sm:$0xff]
  %v1856 = vld [vmem:[%s11 + $0x98] sm:$0xff]
  %v1857 = vld [vmem:[%s11 + $0xa0] sm:$0xff]
  %v1858 = vld [vmem:[%s11 + $0xa8] sm:$0xff]
  %v1859 = vld [vmem:[%s11 + $0xb0] sm:$0xff]
  %v1860 = vld [vmem:[%s11 + $0xb8] sm:$0xff]
  %v1861 = vld [vmem:[%s11 + $0xc0] sm:$0xff]
  %v1862 = vld [vmem:[%s11 + $0xc8] sm:$0xff]
  %v1863 = vld [vmem:[%s11 + $0xd0] sm:$0xff]
  %v1864 = vld [vmem:[%s11 + $0xd8] sm:$0xff]
  %v1865 = vld [vmem:[%s11 + $0xe0] sm:$0xff]
  %v1866 = vld [vmem:[%s11 + $0xe8] sm:$0xff]
  %v1867 = vld [vmem:[%s11 + $0xf0] sm:$0xff]
  %v1868 = vld [vmem:[%s11 + $0xf8] sm:$0xff]
  %1870 = vset.pattern.permute.xlu0 0
  %1871 = vperm.xlu0 %1870, %v1837
  %v1872 = vpop.permute.xlu0 %1871
  %1875 = vset.pattern.permute.xlu0 0
  %1876 = vperm.xlu0 %1875, %v1838
  %v1877 = vpop.permute.xlu0 %1876
  %1880 = vset.pattern.permute.xlu0 0
  %1881 = vperm.xlu0 %1880, %v1839
  %v1882 = vpop.permute.xlu0 %1881
  %1885 = vset.pattern.permute.xlu0 0
  %1886 = vperm.xlu0 %1885, %v1840
  %v1887 = vpop.permute.xlu0 %1886
  %1890 = vset.pattern.permute.xlu0 0
  %1891 = vperm.xlu0 %1890, %v1841
  %v1892 = vpop.permute.xlu0 %1891
  %1895 = vset.pattern.permute.xlu0 0
  %1896 = vperm.xlu0 %1895, %v1842
  %v1897 = vpop.permute.xlu0 %1896
  %1900 = vset.pattern.permute.xlu0 0
  %1901 = vperm.xlu0 %1900, %v1843
  %v1902 = vpop.permute.xlu0 %1901
  %1905 = vset.pattern.permute.xlu0 0
  %1906 = vperm.xlu0 %1905, %v1844
  %v1907 = vpop.permute.xlu0 %1906
  %1910 = vset.pattern.permute.xlu0 0
  %1911 = vperm.xlu0 %1910, %v1845
  %v1912 = vpop.permute.xlu0 %1911
  %1915 = vset.pattern.permute.xlu0 0
  %1916 = vperm.xlu0 %1915, %v1846
  %v1917 = vpop.permute.xlu0 %1916
  %1920 = vset.pattern.permute.xlu0 0
  %1921 = vperm.xlu0 %1920, %v1847
  %v1922 = vpop.permute.xlu0 %1921
  %1925 = vset.pattern.permute.xlu0 0
  %1926 = vperm.xlu0 %1925, %v1848
  %v1927 = vpop.permute.xlu0 %1926
  %1930 = vset.pattern.permute.xlu0 0
  %1931 = vperm.xlu0 %1930, %v1849
  %v1932 = vpop.permute.xlu0 %1931
  %1935 = vset.pattern.permute.xlu0 0
  %1936 = vperm.xlu0 %1935, %v1850
  %v1937 = vpop.permute.xlu0 %1936
  %1940 = vset.pattern.permute.xlu0 0
  %1941 = vperm.xlu0 %1940, %v1851
  %v1942 = vpop.permute.xlu0 %1941
  %1945 = vset.pattern.permute.xlu0 0
  %1946 = vperm.xlu0 %1945, %v1852
  %v1947 = vpop.permute.xlu0 %1946
  %1950 = vset.pattern.permute.xlu0 0
  %1951 = vperm.xlu0 %1950, %v1853
  %v1952 = vpop.permute.xlu0 %1951
  %1955 = vset.pattern.permute.xlu0 0
  %1956 = vperm.xlu0 %1955, %v1854
  %v1957 = vpop.permute.xlu0 %1956
  %1960 = vset.pattern.permute.xlu0 0
  %1961 = vperm.xlu0 %1960, %v1855
  %v1962 = vpop.permute.xlu0 %1961
  %1965 = vset.pattern.permute.xlu0 0
  %1966 = vperm.xlu0 %1965, %v1856
  %v1967 = vpop.permute.xlu0 %1966
  %1970 = vset.pattern.permute.xlu0 0
  %1971 = vperm.xlu0 %1970, %v1857
  %v1972 = vpop.permute.xlu0 %1971
  %1975 = vset.pattern.permute.xlu0 0
  %1976 = vperm.xlu0 %1975, %v1858
  %v1977 = vpop.permute.xlu0 %1976
  %1980 = vset.pattern.permute.xlu0 0
  %1981 = vperm.xlu0 %1980, %v1859
  %v1982 = vpop.permute.xlu0 %1981
  %1985 = vset.pattern.permute.xlu0 0
  %1986 = vperm.xlu0 %1985, %v1860
  %v1987 = vpop.permute.xlu0 %1986
  %1990 = vset.pattern.permute.xlu0 0
  %1991 = vperm.xlu0 %1990, %v1861
  %v1992 = vpop.permute.xlu0 %1991
  %1995 = vset.pattern.permute.xlu0 0
  %1996 = vperm.xlu0 %1995, %v1862
  %v1997 = vpop.permute.xlu0 %1996
  %2000 = vset.pattern.permute.xlu0 0
  %2001 = vperm.xlu0 %2000, %v1863
  %v2002 = vpop.permute.xlu0 %2001
  %2005 = vset.pattern.permute.xlu0 0
  %2006 = vperm.xlu0 %2005, %v1864
  %v2007 = vpop.permute.xlu0 %2006
  %2010 = vset.pattern.permute.xlu0 0
  %2011 = vperm.xlu0 %2010, %v1865
  %v2012 = vpop.permute.xlu0 %2011
  %2015 = vset.pattern.permute.xlu0 0
  %2016 = vperm.xlu0 %2015, %v1866
  %v2017 = vpop.permute.xlu0 %2016
  %2020 = vset.pattern.permute.xlu0 0
  %2021 = vperm.xlu0 %2020, %v1867
  %v2022 = vpop.permute.xlu0 %2021
  %2025 = vset.pattern.permute.xlu0 0
  %2026 = vperm.xlu0 %2025, %v1868
  %v2027 = vpop.permute.xlu0 %2026
  %v2029 = vmul.f32 %v1805, %v1872
  %v2030 = vmul.f32 %v1806, %v1877
  %v2031 = vmul.f32 %v1807, %v1882
  %v2032 = vmul.f32 %v1808, %v1887
  %v2033 = vmul.f32 %v1809, %v1892
  %v2034 = vmul.f32 %v1810, %v1897
  %v2035 = vmul.f32 %v1811, %v1902
  %v2036 = vmul.f32 %v1812, %v1907
  %v2037 = vmul.f32 %v1813, %v1912
  %v2038 = vmul.f32 %v1814, %v1917
  %v2039 = vmul.f32 %v1815, %v1922
  %v2040 = vmul.f32 %v1816, %v1927
  %v2041 = vmul.f32 %v1817, %v1932
  %v2042 = vmul.f32 %v1818, %v1937
  %v2043 = vmul.f32 %v1819, %v1942
  %v2044 = vmul.f32 %v1820, %v1947
  %v2045 = vmul.f32 %v1821, %v1952
  %v2046 = vmul.f32 %v1822, %v1957
  %v2047 = vmul.f32 %v1823, %v1962
  %v2048 = vmul.f32 %v1824, %v1967
  %v2049 = vmul.f32 %v1825, %v1972
  %v2050 = vmul.f32 %v1826, %v1977
  %v2051 = vmul.f32 %v1827, %v1982
  %v2052 = vmul.f32 %v1828, %v1987
  %v2053 = vmul.f32 %v1829, %v1992
  %v2054 = vmul.f32 %v1830, %v1997
  %v2055 = vmul.f32 %v1831, %v2002
  %v2056 = vmul.f32 %v1832, %v2007
  %v2057 = vmul.f32 %v1833, %v2012
  %v2058 = vmul.f32 %v1834, %v2017
  %v2059 = vmul.f32 %v1835, %v2022
  %v2060 = vmul.f32 %v1836, %v2027
  %v2061 = vadd.f32 %v2029, %v2030
  %v2062 = vadd.f32 %v2061, %v2031
  %v2063 = vadd.f32 %v2062, %v2032
  %v2064 = vadd.f32 %v2063, %v2033
  %v2065 = vadd.f32 %v2064, %v2034
  %v2066 = vadd.f32 %v2065, %v2035
  %v2067 = vadd.f32 %v2066, %v2036
  %v2068 = vadd.f32 %v2067, %v2037
  %v2069 = vadd.f32 %v2068, %v2038
  %v2070 = vadd.f32 %v2069, %v2039
  %v2071 = vadd.f32 %v2070, %v2040
  %v2072 = vadd.f32 %v2071, %v2041
  %v2073 = vadd.f32 %v2072, %v2042
  %v2074 = vadd.f32 %v2073, %v2043
  %v2075 = vadd.f32 %v2074, %v2044
  %v2076 = vadd.f32 %v2075, %v2045
  %v2077 = vadd.f32 %v2076, %v2046
  %v2078 = vadd.f32 %v2077, %v2047
  %v2079 = vadd.f32 %v2078, %v2048
  %v2080 = vadd.f32 %v2079, %v2049
  %v2081 = vadd.f32 %v2080, %v2050
  %v2082 = vadd.f32 %v2081, %v2051
  %v2083 = vadd.f32 %v2082, %v2052
  %v2084 = vadd.f32 %v2083, %v2053
  %v2085 = vadd.f32 %v2084, %v2054
  %v2086 = vadd.f32 %v2085, %v2055
  %v2087 = vadd.f32 %v2086, %v2056
  %v2088 = vadd.f32 %v2087, %v2057
  %v2089 = vadd.f32 %v2088, %v2058
  %v2090 = vadd.f32 %v2089, %v2059
  %v2091 = vadd.f32 %v2090, %v2060
  %v2092 = vrot.slane %v2091, 4
  %v2093 = vadd.f32 %v2091, %v2092
  %v2094 = vrot.slane %v2093, 2
  %v2095 = vadd.f32 %v2093, %v2094
  %v2096 = vrot.slane %v2095, 1
  %v2097 = vadd.f32 %v2095, %v2096
  %v2098 = vld [vmem:[#allocation2] sm:$0x1]
  %2100 = vset.pattern.permute.xlu0 0
  %2101 = vperm.xlu0 %2100, %v2098
  %v2102 = vpop.permute.xlu0 %2101
  %v2104 = vlaneseq
  %v2105 = vshrl.u32 %v2104, 7
  %v2106 = vsub.s32 0, %v2105
  %v2107 = vrot.slane %v2102, %v2106
  %v2108 = vadd.f32 %v2097, %v2107
  %v2109 = vsub.f32 0.0, %v2108
  %v2110 = vmul.f32 %v2109, 1.442695
  %v2111 = vpow.pop %v2110
  %v2112 = vadd.f32 %v2111, 1.0
  %v2113 = vrcp.pop %v2112
  %2114 = vst [vmem:[%s13] sm:$0x1] %v2113
  // Predicated region
  $region54: #{discriminator_forward.1} parent=0 // pred_check
    _
  $region55: #{discriminator_forward.1} parent=0 // pred_check_branch
    %2116 = sbr.rel (0) target = $region57
  $region56: #{discriminator_forward.1} parent=0 // pred_region
    _
  $region57: #{discriminator_forward.1} parent=0 // pred_fallthru
    _
  // Predicated region
  $region58: #{discriminator_forward.1} parent=0 // pred_check
    _
  $region59: #{discriminator_forward.1} parent=0 // pred_check_branch
    %2118 = sbr.rel (0) target = $region61
  $region60: #{discriminator_forward.1} parent=0 // pred_region
    _
  $region61: #{discriminator_forward.1} parent=0 // pred_fallthru
    _

</llo_original>
